<compile_context>
chip_gen: v7x
topology: tpu7x:2x2x1
jax: 0.10.0
libtpu: 0.0.40
codegen_flags: <defaults>
</compile_context>

<pallas_src>
import jax
import jax.numpy as jnp
from jax import lax
from jax.experimental import pallas as pl
from jax.experimental.pallas import tpu as pltpu

B, C_IN, C_OUT, H, W = 2, 4, 8, 16, 16
HW = H * W                       # per-sample spatial size (lane-dense: 2 x 128)
NL = B * HW                      # batch folded into the lane axis (4 x 128)
EPS = 1e-5                       # GroupNorm eps (PyTorch default)

TAP_STRIDE = 8                   # rows per tap in the stacked-tap scratch
N_TAPS = 9
TAP_ROWS = N_TAPS * TAP_STRIDE   # 72

assert W & (W - 1) == 0 and HW & (HW - 1) == 0, "masks use bitwise-and (power of two)"
assert C_IN <= TAP_STRIDE and C_OUT <= TAP_STRIDE

# columns of the packed per-channel-vector block (rows = channel index)
(_B1, _G1W, _G1B, _B2, _G2W, _G2B, _RB, _AOB, _AGW, _AGB, _QKVB) = range(11)
_PV_ROWS = max(C_OUT, 3 * C_IN)          # 12
_PV_COLS = 11
_PW_ROWS = C_OUT + 3 * C_IN              # 20: [residual 1x1 ; qkv 1x1] stacked
_WMISC_ROWS = 24                         # _PW_ROWS rounded up to a sublane tile
_WMISC_COLS = 2 * C_IN + _PV_COLS        # 19: [pw | aow | pv]


# ------------------------- in-kernel helpers -------------------------

def _erf(x):
    # XLA's f32 erf rational approximation (ErfImpl32 coefficients), plain VPU ops.
    alpha = (0.00022905065861350646, 0.0034082910107109506, 0.050955695062380861,
             0.18520832239976145, 1.128379143519084)
    beta = (-1.1791602954361697e-07, 2.3547966471313185e-05, 0.0010179625278914885,
            0.014070470171167667, 0.11098505178285362, 0.49746925110067538, 1.0)
    x = jnp.clip(x, -3.832506856900711, 3.832506856900711)
    x2 = x * x
    p = jnp.full_like(x, alpha[0])
    for c in alpha[1:]:
        p = p * x2 + c
    q = jnp.full_like(x, beta[0])
    for c in beta[1:]:
        q = q * x2 + c
    return (x * p) * pl.reciprocal(q, approx=False)


def _gelu(x):
    # exact (erf-based) GELU, matching torch.nn.GELU()
    return 0.5 * x * (1.0 + _erf(x * 0.7071067811865476))


def _seg_mean(u, seg0, denom):
    # per-sample mean of a (C, NL) slab -> (1, NL) map (sample b lives in lane half b;
    # the 0/256 lane slices are (8,128)-tile aligned views).
    m0 = jnp.sum(jnp.sum(u[:, :HW], axis=-1, keepdims=True), axis=0, keepdims=True)
    m1 = jnp.sum(jnp.sum(u[:, HW:], axis=-1, keepdims=True), axis=0, keepdims=True)
    return jnp.where(seg0, m0, m1) * (1.0 / denom)


def _group_norm(t, gamma, beta, seg0):
    # GroupNorm(num_groups=1), normalized per sample over the whole (C, HW).  t: (C, NL)
    n = float(t.shape[0] * HW)
    mu = _seg_mean(t, seg0, n)
    d = t - mu
    var = _seg_mean(d * d, seg0, n)
    return d * (lax.rsqrt(var + EPS) * gamma) + beta


def _make_tap_masks(m_idx, w_idx):
    # Validity masks for the 9 shifted slabs of a 3x3 / padding=1 conv, built ONCE and
    # shared by both convs.  m_idx = per-sample flat spatial index, w_idx = column index.
    # Folding the batch into the lane axis is safe: lanes contaminated by roll wrap-around
    # (between samples or around the array ends) are exactly the masked 1-pixel border.
    masks = []
    for ky in range(3):
        for kx in range(3):
            dy, dx = ky - 1, kx - 1
            conds = []
            if dy < 0:
                conds.append(m_idx >= (-dy) * W)
            if dy > 0:
                conds.append(m_idx < (H - dy) * W)
            if dx < 0:
                conds.append(w_idx >= -dx)
            if dx > 0:
                conds.append(w_idx < W - dx)
            m = None
            for c in conds:
                m = c if m is None else jnp.logical_and(m, c)
            masks.append((dy * W + dx, m))
    return masks


def _conv3x3(tap_ref, x2d, w_flat, bias, masks):
    # 3x3 / padding=1 conv on a (Cin, NL) slab as ONE MXU dot: write the 9 shifted,
    # masked taps into the stacked-tap scratch at an 8-row stride (the unused pad rows
    # stay zero), then contract with the (Cout, 72) tap-major weight slab.
    cin = x2d.shape[0]
    for t, (s, m) in enumerate(masks):
        slab = x2d if s == 0 else pltpu.roll(x2d, shift=(-s) % NL, axis=1)
        if m is not None:
            slab = jnp.where(m, slab, 0.0)       # exact 1-pixel zero border
        tap_ref[pl.ds(t * TAP_STRIDE, cin), :] = slab
    return jnp.dot(w_flat, tap_ref[...], preferred_element_type=jnp.float32) + bias


# ------------------------- the fused kernel -------------------------

def conv_block_kernel(x_ref, wconv_ref, wmisc_ref, o_ref, tap_ref):
    # fold the batch into the lane axis: sample b occupies lanes [b*HW, (b+1)*HW)
    x = jnp.concatenate([x_ref[0], x_ref[1]], axis=1)             # (C_IN, NL)

    wm = wmisc_ref[...]
    pw = wm[0:_PW_ROWS, 0:C_IN]                                   # [rw ; qkvw]   (20, 4)
    aow = wm[0:C_OUT, C_IN:2 * C_IN]                              # (8, 4)

    def vec(col, c):                                              # per-channel vectors
        return wm[0:c, 2 * C_IN + col:2 * C_IN + col + 1]         # (c, 1)

    b1, g1w, g1b = vec(_B1, C_OUT), vec(_G1W, C_OUT), vec(_G1B, C_OUT)
    b2, g2w, g2b = vec(_B2, C_OUT), vec(_G2W, C_OUT), vec(_G2B, C_OUT)
    rb, aob = vec(_RB, C_OUT), vec(_AOB, C_OUT)
    agw, agb = vec(_AGW, C_OUT), vec(_AGB, C_OUT)
    qkvb = vec(_QKVB, 3 * C_IN)

    # lane-index helpers built once (masks + segmented reductions)
    n_idx = lax.broadcasted_iota(jnp.int32, (1, NL), 1)
    m_idx = jnp.bitwise_and(n_idx, HW - 1)                        # per-sample flat index
    w_idx = jnp.bitwise_and(n_idx, W - 1)                         # within-row index
    seg0 = n_idx < HW                                             # sample-0 lanes
    masks = _make_tap_masks(m_idx, w_idx)

    # zero the stacked-tap scratch once (conv1 with Cin=4 only fills 4 of every 8 rows)
    tap_ref[...] = jnp.zeros_like(tap_ref)

    w1 = wconv_ref[0:C_OUT, :]                                    # (8, 72)
    w2 = wconv_ref[C_OUT:2 * C_OUT, :]                            # (8, 72)

    # block: Conv3x3 -> GroupNorm(1) -> GELU -> Conv3x3 -> GroupNorm(1)
    h = _conv3x3(tap_ref, x, w1, b1, masks)
    h = _group_norm(h, g1w, g1b, seg0)
    h = _gelu(h)
    h = _conv3x3(tap_ref, h, w2, b2, masks)
    h = _group_norm(h, g2w, g2b, seg0)

    # residual 1x1 conv and qkv 1x1 conv share one MXU dot
    pt = jnp.dot(pw, x, preferred_element_type=jnp.float32)       # (20, NL)
    out = h + pt[0:C_OUT] + rb
    qkv = pt[C_OUT:_PW_ROWS] + qkvb                               # (12, NL)
    q = qkv[0:C_IN]
    k = qkv[C_IN:2 * C_IN]
    v = qkv[2 * C_IN:3 * C_IN]

    # softmax of k over each sample's spatial axis (segmented max / sum)
    kmax = jnp.where(seg0, jnp.max(k[:, :HW], axis=-1, keepdims=True),
                           jnp.max(k[:, HW:], axis=-1, keepdims=True))
    k = jnp.exp(k - kmax)
    ksum = jnp.where(seg0, jnp.sum(k[:, :HW], axis=-1, keepdims=True),
                           jnp.sum(k[:, HW:], axis=-1, keepdims=True))
    k = k * pl.reciprocal(ksum, approx=False)

    # linear attention: context + output contraction, per sample (lane half)
    def attend(qb, kb, vb):
        # ctx_t[e, d] = sum_n v[e, n] k[d, n];  att[e, n] = sum_d ctx_t[e, d] q[d, n]
        ctx_t = lax.dot_general(vb, kb, (((1,), (1,)), ((), ())),
                                preferred_element_type=jnp.float32)      # (C_IN, C_IN)
        return jnp.dot(ctx_t, qb, preferred_element_type=jnp.float32)    # (C_IN, HW)

    att = jnp.concatenate([attend(q[:, :HW], k[:, :HW], v[:, :HW]),
                           attend(q[:, HW:], k[:, HW:], v[:, HW:])], axis=1)
    a = jnp.dot(aow, att, preferred_element_type=jnp.float32) + aob
    a = _group_norm(a, agw, agb, seg0)
    gate = jnp.tanh(jnp.maximum(a, 0.0))                          # tanh(relu(.))

    # attn branch present -> no final ReLU; output gated by the attention map
    y = out * gate                                                # (C_OUT, NL)
    o_ref[0] = y[:, :HW]                                          # lane-dense (8, 256) stores
    o_ref[1] = y[:, HW:]


# ------------------------- wrapper -------------------------

@jax.jit
def conv_block_pallas(x, wconv, wmisc):
    x3 = x.reshape(B, C_IN, HW)                  # free view; kernel folds B into the lanes
    out = pl.pallas_call(
        conv_block_kernel,
        out_shape=jax.ShapeDtypeStruct((B, C_OUT, HW), jnp.float32),
        scratch_shapes=[pltpu.VMEM((TAP_ROWS, NL), jnp.float32)],   # shared stacked-tap slab
    )(x3, wconv, wmisc)
    return out.reshape(B, C_OUT, H, W)


def pack_params(p):
    """One-time packing of all parameters into two small VMEM-friendly slabs."""
    # 3x3 weights, tap-major with an 8-column stride per tap (column = t*8 + ci), so both
    # convs share the same (72, NL) stacked-tap scratch layout; conv1's unused slots are 0.
    w1 = jnp.transpose(p["w1"], (0, 2, 3, 1)).reshape(C_OUT, N_TAPS, C_IN)
    w1p = jnp.zeros((C_OUT, N_TAPS, TAP_STRIDE), jnp.float32).at[:, :, :C_IN].set(w1)
    w2 = jnp.transpose(p["w2"], (0, 2, 3, 1)).reshape(C_OUT, N_TAPS, C_OUT)
    wconv = jnp.concatenate([w1p.reshape(C_OUT, TAP_ROWS),
                             w2.reshape(C_OUT, TAP_ROWS)], axis=0)          # (16, 72)

    # misc slab: [ [rw;qkvw] | aow | packed per-channel bias/scale vectors ]
    pv = jnp.zeros((_PV_ROWS, _PV_COLS), jnp.float32)
    for col, name in ((_B1, "b1"), (_G1W, "g1w"), (_G1B, "g1b"),
                      (_B2, "b2"), (_G2W, "g2w"), (_G2B, "g2b"),
                      (_RB, "rb"), (_AOB, "aob"), (_AGW, "agw"), (_AGB, "agb")):
        pv = pv.at[:C_OUT, col].set(p[name])
    pv = pv.at[:3 * C_IN, _QKVB].set(p["qkvb"])

    pw = jnp.concatenate([p["rw"][:, :, 0, 0], p["qkvw"][:, :, 0, 0]], axis=0)  # (20, 4)
    wmisc = jnp.zeros((_WMISC_ROWS, _WMISC_COLS), jnp.float32)
    wmisc = wmisc.at[0:_PW_ROWS, 0:C_IN].set(pw)
    wmisc = wmisc.at[0:C_OUT, C_IN:2 * C_IN].set(p["aow"][:, :, 0, 0])
    wmisc = wmisc.at[0:_PV_ROWS, 2 * C_IN:].set(pv)
    return wconv, wmisc


# ------------------- deterministic params + pure-JAX reference -------------------

def init_params(key):
    ks = jax.random.split(key, 16)
    n = lambda k, shape, s=0.25: (s * jax.random.normal(k, shape)).astype(jnp.float32)
    return {
        "w1": n(ks[0], (C_OUT, C_IN, 3, 3)), "b1": n(ks[1], (C_OUT,), 0.1),
        "g1w": 1.0 + n(ks[2], (C_OUT,), 0.1), "g1b": n(ks[3], (C_OUT,), 0.1),
        "w2": n(ks[4], (C_OUT, C_OUT, 3, 3)), "b2": n(ks[5], (C_OUT,), 0.1),
        "g2w": 1.0 + n(ks[6], (C_OUT,), 0.1), "g2b": n(ks[7], (C_OUT,), 0.1),
        "rw": n(ks[8], (C_OUT, C_IN, 1, 1)), "rb": n(ks[9], (C_OUT,), 0.1),
        "qkvw": n(ks[10], (3 * C_IN, C_IN, 1, 1)), "qkvb": n(ks[11], (3 * C_IN,), 0.1),
        "aow": n(ks[12], (C_OUT, C_IN, 1, 1)), "aob": n(ks[13], (C_OUT,), 0.1),
        "agw": 1.0 + n(ks[14], (C_OUT,), 0.1), "agb": n(ks[15], (C_OUT,), 0.1),
    }


def conv_block_reference(x, p):
    hp = lax.Precision.HIGHEST

    def conv3x3(t, w, b):
        y = lax.conv_general_dilated(t, w, (1, 1), ((1, 1), (1, 1)),
                                     dimension_numbers=("NCHW", "OIHW", "NCHW"),
                                     precision=hp)
        return y + b[None, :, None, None]

    def conv1x1(t, w, b):
        y = jnp.einsum("oc,bchw->bohw", w[:, :, 0, 0], t, precision=hp)
        return y + b[None, :, None, None]

    def gn(t, w, b):
        mu = jnp.mean(t, axis=(1, 2, 3), keepdims=True)
        var = jnp.mean((t - mu) ** 2, axis=(1, 2, 3), keepdims=True)
        return (t - mu) / jnp.sqrt(var + EPS) * w[None, :, None, None] + b[None, :, None, None]

    h = conv3x3(x, p["w1"], p["b1"])
    h = gn(h, p["g1w"], p["g1b"])
    h = jax.nn.gelu(h, approximate=False)
    h = conv3x3(h, p["w2"], p["b2"])
    h = gn(h, p["g2w"], p["g2b"])
    out = h + conv1x1(x, p["rw"], p["rb"])

    qkv = conv1x1(x, p["qkvw"], p["qkvb"]).reshape(B, 3, C_IN, H * W)
    q, k, v = qkv[:, 0], qkv[:, 1], qkv[:, 2]
    k = jax.nn.softmax(k, axis=-1)
    ctx = jnp.einsum("bdn,ben->bde", k, v, precision=hp)
    att = jnp.einsum("bde,bdn->ben", ctx, q, precision=hp)
    a = jnp.einsum("oc,bcn->bon", p["aow"][:, :, 0, 0], att, precision=hp)
    a = a + p["aob"][None, :, None]
    a = gn(a.reshape(B, C_OUT, H, W), p["agw"], p["agb"])
    a = jnp.tanh(jax.nn.relu(a))
    return out * a


if __name__ == "__main__":
    key = jax.random.PRNGKey(0)
    kx, kp = jax.random.split(key)
    x = jax.random.normal(kx, (B, C_IN, H, W), dtype=jnp.float32)
    params = init_params(kp)
    wconv, wmisc = pack_params(params)     # one-time packing, hoisted out of the call path

    out = jax.block_until_ready(conv_block_pallas(x, wconv, wmisc))
    ref = jax.block_until_ready(conv_block_reference(x, params))

    assert out.shape == (B, C_OUT, H, W) and out.dtype == jnp.float32
    assert bool(jnp.all(jnp.isfinite(out)))
    max_err = float(jnp.max(jnp.abs(out - ref)))
    assert max_err < 2e-3, f"kernel/reference mismatch: max abs err = {max_err}"
    print("KERNEL_OK")
</pallas_src>

<mosaic_0001>
module attributes {stable_mosaic.version = 11 : i64} {
  func.func @conv_block_kernel(%arg0: memref<2x4x256xf32, #tpu.memory_space<vmem>>, %arg1: memref<16x72xf32, #tpu.memory_space<vmem>>, %arg2: memref<24x19xf32, #tpu.memory_space<vmem>>, %arg3: memref<2x8x256xf32, #tpu.memory_space<vmem>>, %arg4: memref<72x512xf32, #tpu.memory_space<vmem>>) attributes {dimension_semantics = [], scalar_prefetch = 0 : i64, scratch_operands = 1 : i64, tpu.core_type = #tpu.core_type<tc>} {
    %c0 = arith.constant 0 : index
    %c0_0 = arith.constant 0 : index
    %c0_1 = arith.constant 0 : index
    %0 = vector.load %arg0[%c0, %c0_0, %c0_1] : memref<2x4x256xf32, #tpu.memory_space<vmem>>, vector<1x4x256xf32>
    %1 = vector.shape_cast %0 : vector<1x4x256xf32> to vector<4x256xf32>
    %c1 = arith.constant 1 : index
    %c0_2 = arith.constant 0 : index
    %c0_3 = arith.constant 0 : index
    %2 = vector.load %arg0[%c1, %c0_2, %c0_3] : memref<2x4x256xf32, #tpu.memory_space<vmem>>, vector<1x4x256xf32>
    %3 = vector.shape_cast %2 : vector<1x4x256xf32> to vector<4x256xf32>
    %4 = tpu.concatenate %1, %3 in 1 : vector<4x256xf32>, vector<4x256xf32> -> vector<4x512xf32>
    %c0_4 = arith.constant 0 : index
    %c0_5 = arith.constant 0 : index
    %5 = vector.load %arg2[%c0_4, %c0_5] : memref<24x19xf32, #tpu.memory_space<vmem>>, vector<24x19xf32>
    %6 = vector.extract_strided_slice %5 {offsets = [0, 0], sizes = [20, 4], strides = [1, 1]} : vector<24x19xf32> to vector<20x4xf32>
    %7 = vector.extract_strided_slice %5 {offsets = [0, 4], sizes = [8, 4], strides = [1, 1]} : vector<24x19xf32> to vector<8x4xf32>
    %8 = vector.extract_strided_slice %5 {offsets = [0, 8], sizes = [8, 1], strides = [1, 1]} : vector<24x19xf32> to vector<8x1xf32>
    %9 = vector.extract_strided_slice %5 {offsets = [0, 9], sizes = [8, 1], strides = [1, 1]} : vector<24x19xf32> to vector<8x1xf32>
    %10 = vector.extract_strided_slice %5 {offsets = [0, 10], sizes = [8, 1], strides = [1, 1]} : vector<24x19xf32> to vector<8x1xf32>
    %11 = vector.extract_strided_slice %5 {offsets = [0, 11], sizes = [8, 1], strides = [1, 1]} : vector<24x19xf32> to vector<8x1xf32>
    %12 = vector.extract_strided_slice %5 {offsets = [0, 12], sizes = [8, 1], strides = [1, 1]} : vector<24x19xf32> to vector<8x1xf32>
    %13 = vector.extract_strided_slice %5 {offsets = [0, 13], sizes = [8, 1], strides = [1, 1]} : vector<24x19xf32> to vector<8x1xf32>
    %14 = vector.extract_strided_slice %5 {offsets = [0, 14], sizes = [8, 1], strides = [1, 1]} : vector<24x19xf32> to vector<8x1xf32>
    %15 = vector.extract_strided_slice %5 {offsets = [0, 15], sizes = [8, 1], strides = [1, 1]} : vector<24x19xf32> to vector<8x1xf32>
    %16 = vector.extract_strided_slice %5 {offsets = [0, 16], sizes = [8, 1], strides = [1, 1]} : vector<24x19xf32> to vector<8x1xf32>
    %17 = vector.extract_strided_slice %5 {offsets = [0, 17], sizes = [8, 1], strides = [1, 1]} : vector<24x19xf32> to vector<8x1xf32>
    %18 = vector.extract_strided_slice %5 {offsets = [0, 18], sizes = [12, 1], strides = [1, 1]} : vector<24x19xf32> to vector<12x1xf32>
    %19 = tpu.iota {dimensions = array<i32: 1>} : vector<1x512xi32>
    %c255_i32 = arith.constant 255 : i32
    %20 = vector.broadcast %c255_i32 : i32 to vector<1x512xi32>
    %21 = arith.andi %19, %20 : vector<1x512xi32>
    %c15_i32 = arith.constant 15 : i32
    %22 = vector.broadcast %c15_i32 : i32 to vector<1x512xi32>
    %23 = arith.andi %19, %22 : vector<1x512xi32>
    %c256_i32 = arith.constant 256 : i32
    %24 = vector.broadcast %c256_i32 : i32 to vector<1x512xi32>
    %25 = arith.cmpi slt, %19, %24 : vector<1x512xi32>
    %c16_i32 = arith.constant 16 : i32
    %26 = vector.broadcast %c16_i32 : i32 to vector<1x512xi32>
    %27 = arith.cmpi sge, %21, %26 : vector<1x512xi32>
    %c1_i32 = arith.constant 1 : i32
    %28 = vector.broadcast %c1_i32 : i32 to vector<1x512xi32>
    %29 = arith.cmpi sge, %23, %28 : vector<1x512xi32>
    %30 = arith.andi %27, %29 : vector<1x512xi1>
    %c16_i32_6 = arith.constant 16 : i32
    %31 = vector.broadcast %c16_i32_6 : i32 to vector<1x512xi32>
    %32 = arith.cmpi sge, %21, %31 : vector<1x512xi32>
    %c16_i32_7 = arith.constant 16 : i32
    %33 = vector.broadcast %c16_i32_7 : i32 to vector<1x512xi32>
    %34 = arith.cmpi sge, %21, %33 : vector<1x512xi32>
    %c15_i32_8 = arith.constant 15 : i32
    %35 = vector.broadcast %c15_i32_8 : i32 to vector<1x512xi32>
    %36 = arith.cmpi slt, %23, %35 : vector<1x512xi32>
    %37 = arith.andi %34, %36 : vector<1x512xi1>
    %c1_i32_9 = arith.constant 1 : i32
    %38 = vector.broadcast %c1_i32_9 : i32 to vector<1x512xi32>
    %39 = arith.cmpi sge, %23, %38 : vector<1x512xi32>
    %c15_i32_10 = arith.constant 15 : i32
    %40 = vector.broadcast %c15_i32_10 : i32 to vector<1x512xi32>
    %41 = arith.cmpi slt, %23, %40 : vector<1x512xi32>
    %c240_i32 = arith.constant 240 : i32
    %42 = vector.broadcast %c240_i32 : i32 to vector<1x512xi32>
    %43 = arith.cmpi slt, %21, %42 : vector<1x512xi32>
    %c1_i32_11 = arith.constant 1 : i32
    %44 = vector.broadcast %c1_i32_11 : i32 to vector<1x512xi32>
    %45 = arith.cmpi sge, %23, %44 : vector<1x512xi32>
    %46 = arith.andi %43, %45 : vector<1x512xi1>
    %c240_i32_12 = arith.constant 240 : i32
    %47 = vector.broadcast %c240_i32_12 : i32 to vector<1x512xi32>
    %48 = arith.cmpi slt, %21, %47 : vector<1x512xi32>
    %c240_i32_13 = arith.constant 240 : i32
    %49 = vector.broadcast %c240_i32_13 : i32 to vector<1x512xi32>
    %50 = arith.cmpi slt, %21, %49 : vector<1x512xi32>
    %c15_i32_14 = arith.constant 15 : i32
    %51 = vector.broadcast %c15_i32_14 : i32 to vector<1x512xi32>
    %52 = arith.cmpi slt, %23, %51 : vector<1x512xi32>
    %53 = arith.andi %50, %52 : vector<1x512xi1>
    %cst = arith.constant 0.000000e+00 : f32
    %54 = vector.broadcast %cst : f32 to vector<72x512xf32>
    %c0_15 = arith.constant 0 : index
    %c0_16 = arith.constant 0 : index
    %55 = vector.load %arg4[%c0_15, %c0_16] : memref<72x512xf32, #tpu.memory_space<vmem>>, vector<72x512xf32>
    tpu.vector_store %arg4[%c0_15, %c0_16], %54 {strides = array<i32>} : memref<72x512xf32, #tpu.memory_space<vmem>>, vector<72x512xf32>,
    %c0_17 = arith.constant 0 : index
    %c0_18 = arith.constant 0 : index
    %56 = vector.load %arg1[%c0_17, %c0_18] : memref<16x72xf32, #tpu.memory_space<vmem>>, vector<8x72xf32>
    %c8 = arith.constant 8 : index
    %c0_19 = arith.constant 0 : index
    %57 = vector.load %arg1[%c8, %c0_19] : memref<16x72xf32, #tpu.memory_space<vmem>>, vector<8x72xf32>
    %c17_i32 = arith.constant 17 : i32
    %58 = tpu.dynamic_rotate %4 by %c17_i32 dim 1 : vector<4x512xf32>, i32 -> vector<4x512xf32>
    %cst_20 = arith.constant 0.000000e+00 : f32
    %59 = vector.shape_cast %30 : vector<1x512xi1> to vector<1x512xi1>
    %60 = vector.broadcast %59 : vector<1x512xi1> to vector<4x512xi1>
    %61 = vector.broadcast %cst_20 : f32 to vector<4x512xf32>
    %62 = arith.select %60, %58, %61 : vector<4x512xi1>, vector<4x512xf32>
    %c0_21 = arith.constant 0 : index
    %c0_22 = arith.constant 0 : index
    %63 = vector.load %arg4[%c0_21, %c0_22] : memref<72x512xf32, #tpu.memory_space<vmem>>, vector<4x512xf32>
    tpu.vector_store %arg4[%c0_21, %c0_22], %62 {strides = array<i32>} : memref<72x512xf32, #tpu.memory_space<vmem>>, vector<4x512xf32>,
    %c16_i32_23 = arith.constant 16 : i32
    %64 = tpu.dynamic_rotate %4 by %c16_i32_23 dim 1 : vector<4x512xf32>, i32 -> vector<4x512xf32>
    %cst_24 = arith.constant 0.000000e+00 : f32
    %65 = vector.shape_cast %32 : vector<1x512xi1> to vector<1x512xi1>
    %66 = vector.broadcast %65 : vector<1x512xi1> to vector<4x512xi1>
    %67 = vector.broadcast %cst_24 : f32 to vector<4x512xf32>
    %68 = arith.select %66, %64, %67 : vector<4x512xi1>, vector<4x512xf32>
    %c8_25 = arith.constant 8 : index
    %c0_26 = arith.constant 0 : index
    %69 = vector.load %arg4[%c8_25, %c0_26] : memref<72x512xf32, #tpu.memory_space<vmem>>, vector<4x512xf32>
    tpu.vector_store %arg4[%c8_25, %c0_26], %68 {strides = array<i32>} : memref<72x512xf32, #tpu.memory_space<vmem>>, vector<4x512xf32>,
    %c15_i32_27 = arith.constant 15 : i32
    %70 = tpu.dynamic_rotate %4 by %c15_i32_27 dim 1 : vector<4x512xf32>, i32 -> vector<4x512xf32>
    %cst_28 = arith.constant 0.000000e+00 : f32
    %71 = vector.shape_cast %37 : vector<1x512xi1> to vector<1x512xi1>
    %72 = vector.broadcast %71 : vector<1x512xi1> to vector<4x512xi1>
    %73 = vector.broadcast %cst_28 : f32 to vector<4x512xf32>
    %74 = arith.select %72, %70, %73 : vector<4x512xi1>, vector<4x512xf32>
    %c16 = arith.constant 16 : index
    %c0_29 = arith.constant 0 : index
    %75 = vector.load %arg4[%c16, %c0_29] : memref<72x512xf32, #tpu.memory_space<vmem>>, vector<4x512xf32>
    tpu.vector_store %arg4[%c16, %c0_29], %74 {strides = array<i32>} : memref<72x512xf32, #tpu.memory_space<vmem>>, vector<4x512xf32>,
    %c1_i32_30 = arith.constant 1 : i32
    %76 = tpu.dynamic_rotate %4 by %c1_i32_30 dim 1 : vector<4x512xf32>, i32 -> vector<4x512xf32>
    %cst_31 = arith.constant 0.000000e+00 : f32
    %77 = vector.shape_cast %39 : vector<1x512xi1> to vector<1x512xi1>
    %78 = vector.broadcast %77 : vector<1x512xi1> to vector<4x512xi1>
    %79 = vector.broadcast %cst_31 : f32 to vector<4x512xf32>
    %80 = arith.select %78, %76, %79 : vector<4x512xi1>, vector<4x512xf32>
    %c24 = arith.constant 24 : index
    %c0_32 = arith.constant 0 : index
    %81 = vector.load %arg4[%c24, %c0_32] : memref<72x512xf32, #tpu.memory_space<vmem>>, vector<4x512xf32>
    tpu.vector_store %arg4[%c24, %c0_32], %80 {strides = array<i32>} : memref<72x512xf32, #tpu.memory_space<vmem>>, vector<4x512xf32>,
    %c32 = arith.constant 32 : index
    %c0_33 = arith.constant 0 : index
    %82 = vector.load %arg4[%c32, %c0_33] : memref<72x512xf32, #tpu.memory_space<vmem>>, vector<4x512xf32>
    tpu.vector_store %arg4[%c32, %c0_33], %4 {strides = array<i32>} : memref<72x512xf32, #tpu.memory_space<vmem>>, vector<4x512xf32>,
    %c511_i32 = arith.constant 511 : i32
    %83 = tpu.dynamic_rotate %4 by %c511_i32 dim 1 : vector<4x512xf32>, i32 -> vector<4x512xf32>
    %cst_34 = arith.constant 0.000000e+00 : f32
    %84 = vector.shape_cast %41 : vector<1x512xi1> to vector<1x512xi1>
    %85 = vector.broadcast %84 : vector<1x512xi1> to vector<4x512xi1>
    %86 = vector.broadcast %cst_34 : f32 to vector<4x512xf32>
    %87 = arith.select %85, %83, %86 : vector<4x512xi1>, vector<4x512xf32>
    %c40 = arith.constant 40 : index
    %c0_35 = arith.constant 0 : index
    %88 = vector.load %arg4[%c40, %c0_35] : memref<72x512xf32, #tpu.memory_space<vmem>>, vector<4x512xf32>
    tpu.vector_store %arg4[%c40, %c0_35], %87 {strides = array<i32>} : memref<72x512xf32, #tpu.memory_space<vmem>>, vector<4x512xf32>,
    %c497_i32 = arith.constant 497 : i32
    %89 = tpu.dynamic_rotate %4 by %c497_i32 dim 1 : vector<4x512xf32>, i32 -> vector<4x512xf32>
    %cst_36 = arith.constant 0.000000e+00 : f32
    %90 = vector.shape_cast %46 : vector<1x512xi1> to vector<1x512xi1>
    %91 = vector.broadcast %90 : vector<1x512xi1> to vector<4x512xi1>
    %92 = vector.broadcast %cst_36 : f32 to vector<4x512xf32>
    %93 = arith.select %91, %89, %92 : vector<4x512xi1>, vector<4x512xf32>
    %c48 = arith.constant 48 : index
    %c0_37 = arith.constant 0 : index
    %94 = vector.load %arg4[%c48, %c0_37] : memref<72x512xf32, #tpu.memory_space<vmem>>, vector<4x512xf32>
    tpu.vector_store %arg4[%c48, %c0_37], %93 {strides = array<i32>} : memref<72x512xf32, #tpu.memory_space<vmem>>, vector<4x512xf32>,
    %c496_i32 = arith.constant 496 : i32
    %95 = tpu.dynamic_rotate %4 by %c496_i32 dim 1 : vector<4x512xf32>, i32 -> vector<4x512xf32>
    %cst_38 = arith.constant 0.000000e+00 : f32
    %96 = vector.shape_cast %48 : vector<1x512xi1> to vector<1x512xi1>
    %97 = vector.broadcast %96 : vector<1x512xi1> to vector<4x512xi1>
    %98 = vector.broadcast %cst_38 : f32 to vector<4x512xf32>
    %99 = arith.select %97, %95, %98 : vector<4x512xi1>, vector<4x512xf32>
    %c56 = arith.constant 56 : index
    %c0_39 = arith.constant 0 : index
    %100 = vector.load %arg4[%c56, %c0_39] : memref<72x512xf32, #tpu.memory_space<vmem>>, vector<4x512xf32>
    tpu.vector_store %arg4[%c56, %c0_39], %99 {strides = array<i32>} : memref<72x512xf32, #tpu.memory_space<vmem>>, vector<4x512xf32>,
    %c495_i32 = arith.constant 495 : i32
    %101 = tpu.dynamic_rotate %4 by %c495_i32 dim 1 : vector<4x512xf32>, i32 -> vector<4x512xf32>
    %cst_40 = arith.constant 0.000000e+00 : f32
    %102 = vector.shape_cast %53 : vector<1x512xi1> to vector<1x512xi1>
    %103 = vector.broadcast %102 : vector<1x512xi1> to vector<4x512xi1>
    %104 = vector.broadcast %cst_40 : f32 to vector<4x512xf32>
    %105 = arith.select %103, %101, %104 : vector<4x512xi1>, vector<4x512xf32>
    %c64 = arith.constant 64 : index
    %c0_41 = arith.constant 0 : index
    %106 = vector.load %arg4[%c64, %c0_41] : memref<72x512xf32, #tpu.memory_space<vmem>>, vector<4x512xf32>
    tpu.vector_store %arg4[%c64, %c0_41], %105 {strides = array<i32>} : memref<72x512xf32, #tpu.memory_space<vmem>>, vector<4x512xf32>,
    %c0_42 = arith.constant 0 : index
    %c0_43 = arith.constant 0 : index
    %107 = vector.load %arg4[%c0_42, %c0_43] : memref<72x512xf32, #tpu.memory_space<vmem>>, vector<72x512xf32>
    %cst_44 = arith.constant dense<0.000000e+00> : vector<8x512xf32>
    %108 = tpu.matmul %56, %107, %cst_44 {dimension_numbers = #tpu.dot_dimension_numbers<[1], [0], [0], [1], [0, 0, 1, 1], [], []>} : vector<8x72xf32>, vector<72x512xf32>, vector<8x512xf32> -> vector<8x512xf32>
    %109 = vector.broadcast %8 : vector<8x1xf32> to vector<8x512xf32>
    %110 = arith.addf %108, %109 : vector<8x512xf32>
    %111 = vector.extract_strided_slice %110 {offsets = [0, 0], sizes = [8, 256], strides = [1, 1]} : vector<8x512xf32> to vector<8x256xf32>
    %cst_45 = arith.constant dense<0.000000e+00> : vector<8xf32>
    %112 = vector.multi_reduction <add>, %111, %cst_45 [1] : vector<8x256xf32> to vector<8xf32>
    %113 = vector.shape_cast %112 : vector<8xf32> to vector<8x1xf32>
    %cst_46 = arith.constant dense<0.000000e+00> : vector<1xf32>
    %114 = vector.multi_reduction <add>, %113, %cst_46 [0] : vector<8x1xf32> to vector<1xf32>
    %115 = vector.shape_cast %114 : vector<1xf32> to vector<1x1xf32>
    %116 = vector.extract_strided_slice %110 {offsets = [0, 256], sizes = [8, 256], strides = [1, 1]} : vector<8x512xf32> to vector<8x256xf32>
    %cst_47 = arith.constant dense<0.000000e+00> : vector<8xf32>
    %117 = vector.multi_reduction <add>, %116, %cst_47 [1] : vector<8x256xf32> to vector<8xf32>
    %118 = vector.shape_cast %117 : vector<8xf32> to vector<8x1xf32>
    %cst_48 = arith.constant dense<0.000000e+00> : vector<1xf32>
    %119 = vector.multi_reduction <add>, %118, %cst_48 [0] : vector<8x1xf32> to vector<1xf32>
    %120 = vector.shape_cast %119 : vector<1xf32> to vector<1x1xf32>
    %121 = vector.shape_cast %115 : vector<1x1xf32> to vector<1x1xf32>
    %122 = vector.broadcast %121 : vector<1x1xf32> to vector<1x512xf32>
    %123 = vector.shape_cast %120 : vector<1x1xf32> to vector<1x1xf32>
    %124 = vector.broadcast %123 : vector<1x1xf32> to vector<1x512xf32>
    %125 = arith.select %25, %122, %124 : vector<1x512xi1>, vector<1x512xf32>
    %cst_49 = arith.constant 4.8828125E-4 : f32
    %126 = vector.broadcast %cst_49 : f32 to vector<1x512xf32>
    %127 = arith.mulf %125, %126 : vector<1x512xf32>
    %128 = vector.broadcast %127 : vector<1x512xf32> to vector<8x512xf32>
    %129 = arith.subf %110, %128 : vector<8x512xf32>
    %130 = arith.mulf %129, %129 : vector<8x512xf32>
    %131 = vector.extract_strided_slice %130 {offsets = [0, 0], sizes = [8, 256], strides = [1, 1]} : vector<8x512xf32> to vector<8x256xf32>
    %cst_50 = arith.constant dense<0.000000e+00> : vector<8xf32>
    %132 = vector.multi_reduction <add>, %131, %cst_50 [1] : vector<8x256xf32> to vector<8xf32>
    %133 = vector.shape_cast %132 : vector<8xf32> to vector<8x1xf32>
    %cst_51 = arith.constant dense<0.000000e+00> : vector<1xf32>
    %134 = vector.multi_reduction <add>, %133, %cst_51 [0] : vector<8x1xf32> to vector<1xf32>
    %135 = vector.shape_cast %134 : vector<1xf32> to vector<1x1xf32>
    %136 = vector.extract_strided_slice %130 {offsets = [0, 256], sizes = [8, 256], strides = [1, 1]} : vector<8x512xf32> to vector<8x256xf32>
    %cst_52 = arith.constant dense<0.000000e+00> : vector<8xf32>
    %137 = vector.multi_reduction <add>, %136, %cst_52 [1] : vector<8x256xf32> to vector<8xf32>
    %138 = vector.shape_cast %137 : vector<8xf32> to vector<8x1xf32>
    %cst_53 = arith.constant dense<0.000000e+00> : vector<1xf32>
    %139 = vector.multi_reduction <add>, %138, %cst_53 [0] : vector<8x1xf32> to vector<1xf32>
    %140 = vector.shape_cast %139 : vector<1xf32> to vector<1x1xf32>
    %141 = vector.shape_cast %135 : vector<1x1xf32> to vector<1x1xf32>
    %142 = vector.broadcast %141 : vector<1x1xf32> to vector<1x512xf32>
    %143 = vector.shape_cast %140 : vector<1x1xf32> to vector<1x1xf32>
    %144 = vector.broadcast %143 : vector<1x1xf32> to vector<1x512xf32>
    %145 = arith.select %25, %142, %144 : vector<1x512xi1>, vector<1x512xf32>
    %cst_54 = arith.constant 4.8828125E-4 : f32
    %146 = vector.broadcast %cst_54 : f32 to vector<1x512xf32>
    %147 = arith.mulf %145, %146 : vector<1x512xf32>
    %cst_55 = arith.constant 9.99999974E-6 : f32
    %148 = vector.broadcast %cst_55 : f32 to vector<1x512xf32>
    %149 = arith.addf %147, %148 : vector<1x512xf32>
    %150 = math.rsqrt %149 : vector<1x512xf32>
    %151 = vector.broadcast %150 : vector<1x512xf32> to vector<8x512xf32>
    %152 = vector.broadcast %9 : vector<8x1xf32> to vector<8x512xf32>
    %153 = arith.mulf %151, %152 : vector<8x512xf32>
    %154 = arith.mulf %129, %153 : vector<8x512xf32>
    %155 = vector.broadcast %10 : vector<8x1xf32> to vector<8x512xf32>
    %156 = arith.addf %154, %155 : vector<8x512xf32>
    %cst_56 = arith.constant 5.000000e-01 : f32
    %157 = vector.broadcast %cst_56 : f32 to vector<8x512xf32>
    %158 = arith.mulf %157, %156 : vector<8x512xf32>
    %cst_57 = arith.constant 0.707106769 : f32
    %159 = vector.broadcast %cst_57 : f32 to vector<8x512xf32>
    %160 = arith.mulf %156, %159 : vector<8x512xf32>
    %cst_58 = arith.constant -3.8325069 : f32
    %cst_59 = arith.constant 3.8325069 : f32
    %161 = vector.broadcast %cst_58 : f32 to vector<8x512xf32>
    %162 = arith.maximumf %161, %160 : vector<8x512xf32>
    %163 = vector.broadcast %cst_59 : f32 to vector<8x512xf32>
    %164 = arith.minimumf %163, %162 : vector<8x512xf32>
    %165 = arith.mulf %164, %164 : vector<8x512xf32>
    %cst_60 = arith.constant 2.29050653E-4 : f32
    %166 = vector.broadcast %cst_60 : f32 to vector<8x512xf32>
    %167 = arith.mulf %166, %165 : vector<8x512xf32>
    %cst_61 = arith.constant 0.00340829091 : f32
    %168 = vector.broadcast %cst_61 : f32 to vector<8x512xf32>
    %169 = arith.addf %167, %168 : vector<8x512xf32>
    %170 = arith.mulf %169, %165 : vector<8x512xf32>
    %cst_62 = arith.constant 0.0509556942 : f32
    %171 = vector.broadcast %cst_62 : f32 to vector<8x512xf32>
    %172 = arith.addf %170, %171 : vector<8x512xf32>
    %173 = arith.mulf %172, %165 : vector<8x512xf32>
    %cst_63 = arith.constant 0.185208321 : f32
    %174 = vector.broadcast %cst_63 : f32 to vector<8x512xf32>
    %175 = arith.addf %173, %174 : vector<8x512xf32>
    %176 = arith.mulf %175, %165 : vector<8x512xf32>
    %cst_64 = arith.constant 1.12837911 : f32
    %177 = vector.broadcast %cst_64 : f32 to vector<8x512xf32>
    %178 = arith.addf %176, %177 : vector<8x512xf32>
    %cst_65 = arith.constant -1.17916031E-7 : f32
    %179 = vector.broadcast %cst_65 : f32 to vector<8x512xf32>
    %180 = arith.mulf %179, %165 : vector<8x512xf32>
    %cst_66 = arith.constant 2.35479656E-5 : f32
    %181 = vector.broadcast %cst_66 : f32 to vector<8x512xf32>
    %182 = arith.addf %180, %181 : vector<8x512xf32>
    %183 = arith.mulf %182, %165 : vector<8x512xf32>
    %cst_67 = arith.constant 0.00101796258 : f32
    %184 = vector.broadcast %cst_67 : f32 to vector<8x512xf32>
    %185 = arith.addf %183, %184 : vector<8x512xf32>
    %186 = arith.mulf %185, %165 : vector<8x512xf32>
    %cst_68 = arith.constant 0.0140704699 : f32
    %187 = vector.broadcast %cst_68 : f32 to vector<8x512xf32>
    %188 = arith.addf %186, %187 : vector<8x512xf32>
    %189 = arith.mulf %188, %165 : vector<8x512xf32>
    %cst_69 = arith.constant 0.110985048 : f32
    %190 = vector.broadcast %cst_69 : f32 to vector<8x512xf32>
    %191 = arith.addf %189, %190 : vector<8x512xf32>
    %192 = arith.mulf %191, %165 : vector<8x512xf32>
    %cst_70 = arith.constant 0.497469246 : f32
    %193 = vector.broadcast %cst_70 : f32 to vector<8x512xf32>
    %194 = arith.addf %192, %193 : vector<8x512xf32>
    %195 = arith.mulf %194, %165 : vector<8x512xf32>
    %cst_71 = arith.constant 1.000000e+00 : f32
    %196 = vector.broadcast %cst_71 : f32 to vector<8x512xf32>
    %197 = arith.addf %195, %196 : vector<8x512xf32>
    %198 = arith.mulf %164, %178 : vector<8x512xf32>
    %199 = tpu.reciprocal %197 : vector<8x512xf32> -> vector<8x512xf32>
    %200 = arith.mulf %198, %199 : vector<8x512xf32>
    %cst_72 = arith.constant 1.000000e+00 : f32
    %201 = vector.broadcast %cst_72 : f32 to vector<8x512xf32>
    %202 = arith.addf %201, %200 : vector<8x512xf32>
    %203 = arith.mulf %158, %202 : vector<8x512xf32>
    %c17_i32_73 = arith.constant 17 : i32
    %204 = tpu.dynamic_rotate %203 by %c17_i32_73 dim 1 : vector<8x512xf32>, i32 -> vector<8x512xf32>
    %cst_74 = arith.constant 0.000000e+00 : f32
    %205 = vector.shape_cast %30 : vector<1x512xi1> to vector<1x512xi1>
    %206 = vector.broadcast %205 : vector<1x512xi1> to vector<8x512xi1>
    %207 = vector.broadcast %cst_74 : f32 to vector<8x512xf32>
    %208 = arith.select %206, %204, %207 : vector<8x512xi1>, vector<8x512xf32>
    %c0_75 = arith.constant 0 : index
    %c0_76 = arith.constant 0 : index
    %209 = vector.load %arg4[%c0_75, %c0_76] : memref<72x512xf32, #tpu.memory_space<vmem>>, vector<8x512xf32>
    tpu.vector_store %arg4[%c0_75, %c0_76], %208 {strides = array<i32>} : memref<72x512xf32, #tpu.memory_space<vmem>>, vector<8x512xf32>,
    %c16_i32_77 = arith.constant 16 : i32
    %210 = tpu.dynamic_rotate %203 by %c16_i32_77 dim 1 : vector<8x512xf32>, i32 -> vector<8x512xf32>
    %cst_78 = arith.constant 0.000000e+00 : f32
    %211 = vector.shape_cast %32 : vector<1x512xi1> to vector<1x512xi1>
    %212 = vector.broadcast %211 : vector<1x512xi1> to vector<8x512xi1>
    %213 = vector.broadcast %cst_78 : f32 to vector<8x512xf32>
    %214 = arith.select %212, %210, %213 : vector<8x512xi1>, vector<8x512xf32>
    %c8_79 = arith.constant 8 : index
    %c0_80 = arith.constant 0 : index
    %215 = vector.load %arg4[%c8_79, %c0_80] : memref<72x512xf32, #tpu.memory_space<vmem>>, vector<8x512xf32>
    tpu.vector_store %arg4[%c8_79, %c0_80], %214 {strides = array<i32>} : memref<72x512xf32, #tpu.memory_space<vmem>>, vector<8x512xf32>,
    %c15_i32_81 = arith.constant 15 : i32
    %216 = tpu.dynamic_rotate %203 by %c15_i32_81 dim 1 : vector<8x512xf32>, i32 -> vector<8x512xf32>
    %cst_82 = arith.constant 0.000000e+00 : f32
    %217 = vector.shape_cast %37 : vector<1x512xi1> to vector<1x512xi1>
    %218 = vector.broadcast %217 : vector<1x512xi1> to vector<8x512xi1>
    %219 = vector.broadcast %cst_82 : f32 to vector<8x512xf32>
    %220 = arith.select %218, %216, %219 : vector<8x512xi1>, vector<8x512xf32>
    %c16_83 = arith.constant 16 : index
    %c0_84 = arith.constant 0 : index
    %221 = vector.load %arg4[%c16_83, %c0_84] : memref<72x512xf32, #tpu.memory_space<vmem>>, vector<8x512xf32>
    tpu.vector_store %arg4[%c16_83, %c0_84], %220 {strides = array<i32>} : memref<72x512xf32, #tpu.memory_space<vmem>>, vector<8x512xf32>,
    %c1_i32_85 = arith.constant 1 : i32
    %222 = tpu.dynamic_rotate %203 by %c1_i32_85 dim 1 : vector<8x512xf32>, i32 -> vector<8x512xf32>
    %cst_86 = arith.constant 0.000000e+00 : f32
    %223 = vector.shape_cast %39 : vector<1x512xi1> to vector<1x512xi1>
    %224 = vector.broadcast %223 : vector<1x512xi1> to vector<8x512xi1>
    %225 = vector.broadcast %cst_86 : f32 to vector<8x512xf32>
    %226 = arith.select %224, %222, %225 : vector<8x512xi1>, vector<8x512xf32>
    %c24_87 = arith.constant 24 : index
    %c0_88 = arith.constant 0 : index
    %227 = vector.load %arg4[%c24_87, %c0_88] : memref<72x512xf32, #tpu.memory_space<vmem>>, vector<8x512xf32>
    tpu.vector_store %arg4[%c24_87, %c0_88], %226 {strides = array<i32>} : memref<72x512xf32, #tpu.memory_space<vmem>>, vector<8x512xf32>,
    %c32_89 = arith.constant 32 : index
    %c0_90 = arith.constant 0 : index
    %228 = vector.load %arg4[%c32_89, %c0_90] : memref<72x512xf32, #tpu.memory_space<vmem>>, vector<8x512xf32>
    tpu.vector_store %arg4[%c32_89, %c0_90], %203 {strides = array<i32>} : memref<72x512xf32, #tpu.memory_space<vmem>>, vector<8x512xf32>,
    %c511_i32_91 = arith.constant 511 : i32
    %229 = tpu.dynamic_rotate %203 by %c511_i32_91 dim 1 : vector<8x512xf32>, i32 -> vector<8x512xf32>
    %cst_92 = arith.constant 0.000000e+00 : f32
    %230 = vector.shape_cast %41 : vector<1x512xi1> to vector<1x512xi1>
    %231 = vector.broadcast %230 : vector<1x512xi1> to vector<8x512xi1>
    %232 = vector.broadcast %cst_92 : f32 to vector<8x512xf32>
    %233 = arith.select %231, %229, %232 : vector<8x512xi1>, vector<8x512xf32>
    %c40_93 = arith.constant 40 : index
    %c0_94 = arith.constant 0 : index
    %234 = vector.load %arg4[%c40_93, %c0_94] : memref<72x512xf32, #tpu.memory_space<vmem>>, vector<8x512xf32>
    tpu.vector_store %arg4[%c40_93, %c0_94], %233 {strides = array<i32>} : memref<72x512xf32, #tpu.memory_space<vmem>>, vector<8x512xf32>,
    %c497_i32_95 = arith.constant 497 : i32
    %235 = tpu.dynamic_rotate %203 by %c497_i32_95 dim 1 : vector<8x512xf32>, i32 -> vector<8x512xf32>
    %cst_96 = arith.constant 0.000000e+00 : f32
    %236 = vector.shape_cast %46 : vector<1x512xi1> to vector<1x512xi1>
    %237 = vector.broadcast %236 : vector<1x512xi1> to vector<8x512xi1>
    %238 = vector.broadcast %cst_96 : f32 to vector<8x512xf32>
    %239 = arith.select %237, %235, %238 : vector<8x512xi1>, vector<8x512xf32>
    %c48_97 = arith.constant 48 : index
    %c0_98 = arith.constant 0 : index
    %240 = vector.load %arg4[%c48_97, %c0_98] : memref<72x512xf32, #tpu.memory_space<vmem>>, vector<8x512xf32>
    tpu.vector_store %arg4[%c48_97, %c0_98], %239 {strides = array<i32>} : memref<72x512xf32, #tpu.memory_space<vmem>>, vector<8x512xf32>,
    %c496_i32_99 = arith.constant 496 : i32
    %241 = tpu.dynamic_rotate %203 by %c496_i32_99 dim 1 : vector<8x512xf32>, i32 -> vector<8x512xf32>
    %cst_100 = arith.constant 0.000000e+00 : f32
    %242 = vector.shape_cast %48 : vector<1x512xi1> to vector<1x512xi1>
    %243 = vector.broadcast %242 : vector<1x512xi1> to vector<8x512xi1>
    %244 = vector.broadcast %cst_100 : f32 to vector<8x512xf32>
    %245 = arith.select %243, %241, %244 : vector<8x512xi1>, vector<8x512xf32>
    %c56_101 = arith.constant 56 : index
    %c0_102 = arith.constant 0 : index
    %246 = vector.load %arg4[%c56_101, %c0_102] : memref<72x512xf32, #tpu.memory_space<vmem>>, vector<8x512xf32>
    tpu.vector_store %arg4[%c56_101, %c0_102], %245 {strides = array<i32>} : memref<72x512xf32, #tpu.memory_space<vmem>>, vector<8x512xf32>,
    %c495_i32_103 = arith.constant 495 : i32
    %247 = tpu.dynamic_rotate %203 by %c495_i32_103 dim 1 : vector<8x512xf32>, i32 -> vector<8x512xf32>
    %cst_104 = arith.constant 0.000000e+00 : f32
    %248 = vector.shape_cast %53 : vector<1x512xi1> to vector<1x512xi1>
    %249 = vector.broadcast %248 : vector<1x512xi1> to vector<8x512xi1>
    %250 = vector.broadcast %cst_104 : f32 to vector<8x512xf32>
    %251 = arith.select %249, %247, %250 : vector<8x512xi1>, vector<8x512xf32>
    %c64_105 = arith.constant 64 : index
    %c0_106 = arith.constant 0 : index
    %252 = vector.load %arg4[%c64_105, %c0_106] : memref<72x512xf32, #tpu.memory_space<vmem>>, vector<8x512xf32>
    tpu.vector_store %arg4[%c64_105, %c0_106], %251 {strides = array<i32>} : memref<72x512xf32, #tpu.memory_space<vmem>>, vector<8x512xf32>,
    %c0_107 = arith.constant 0 : index
    %c0_108 = arith.constant 0 : index
    %253 = vector.load %arg4[%c0_107, %c0_108] : memref<72x512xf32, #tpu.memory_space<vmem>>, vector<72x512xf32>
    %cst_109 = arith.constant dense<0.000000e+00> : vector<8x512xf32>
    %254 = tpu.matmul %57, %253, %cst_109 {dimension_numbers = #tpu.dot_dimension_numbers<[1], [0], [0], [1], [0, 0, 1, 1], [], []>} : vector<8x72xf32>, vector<72x512xf32>, vector<8x512xf32> -> vector<8x512xf32>
    %255 = vector.broadcast %11 : vector<8x1xf32> to vector<8x512xf32>
    %256 = arith.addf %254, %255 : vector<8x512xf32>
    %257 = vector.extract_strided_slice %256 {offsets = [0, 0], sizes = [8, 256], strides = [1, 1]} : vector<8x512xf32> to vector<8x256xf32>
    %cst_110 = arith.constant dense<0.000000e+00> : vector<8xf32>
    %258 = vector.multi_reduction <add>, %257, %cst_110 [1] : vector<8x256xf32> to vector<8xf32>
    %259 = vector.shape_cast %258 : vector<8xf32> to vector<8x1xf32>
    %cst_111 = arith.constant dense<0.000000e+00> : vector<1xf32>
    %260 = vector.multi_reduction <add>, %259, %cst_111 [0] : vector<8x1xf32> to vector<1xf32>
    %261 = vector.shape_cast %260 : vector<1xf32> to vector<1x1xf32>
    %262 = vector.extract_strided_slice %256 {offsets = [0, 256], sizes = [8, 256], strides = [1, 1]} : vector<8x512xf32> to vector<8x256xf32>
    %cst_112 = arith.constant dense<0.000000e+00> : vector<8xf32>
    %263 = vector.multi_reduction <add>, %262, %cst_112 [1] : vector<8x256xf32> to vector<8xf32>
    %264 = vector.shape_cast %263 : vector<8xf32> to vector<8x1xf32>
    %cst_113 = arith.constant dense<0.000000e+00> : vector<1xf32>
    %265 = vector.multi_reduction <add>, %264, %cst_113 [0] : vector<8x1xf32> to vector<1xf32>
    %266 = vector.shape_cast %265 : vector<1xf32> to vector<1x1xf32>
    %267 = vector.shape_cast %261 : vector<1x1xf32> to vector<1x1xf32>
    %268 = vector.broadcast %267 : vector<1x1xf32> to vector<1x512xf32>
    %269 = vector.shape_cast %266 : vector<1x1xf32> to vector<1x1xf32>
    %270 = vector.broadcast %269 : vector<1x1xf32> to vector<1x512xf32>
    %271 = arith.select %25, %268, %270 : vector<1x512xi1>, vector<1x512xf32>
    %cst_114 = arith.constant 4.8828125E-4 : f32
    %272 = vector.broadcast %cst_114 : f32 to vector<1x512xf32>
    %273 = arith.mulf %271, %272 : vector<1x512xf32>
    %274 = vector.broadcast %273 : vector<1x512xf32> to vector<8x512xf32>
    %275 = arith.subf %256, %274 : vector<8x512xf32>
    %276 = arith.mulf %275, %275 : vector<8x512xf32>
    %277 = vector.extract_strided_slice %276 {offsets = [0, 0], sizes = [8, 256], strides = [1, 1]} : vector<8x512xf32> to vector<8x256xf32>
    %cst_115 = arith.constant dense<0.000000e+00> : vector<8xf32>
    %278 = vector.multi_reduction <add>, %277, %cst_115 [1] : vector<8x256xf32> to vector<8xf32>
    %279 = vector.shape_cast %278 : vector<8xf32> to vector<8x1xf32>
    %cst_116 = arith.constant dense<0.000000e+00> : vector<1xf32>
    %280 = vector.multi_reduction <add>, %279, %cst_116 [0] : vector<8x1xf32> to vector<1xf32>
    %281 = vector.shape_cast %280 : vector<1xf32> to vector<1x1xf32>
    %282 = vector.extract_strided_slice %276 {offsets = [0, 256], sizes = [8, 256], strides = [1, 1]} : vector<8x512xf32> to vector<8x256xf32>
    %cst_117 = arith.constant dense<0.000000e+00> : vector<8xf32>
    %283 = vector.multi_reduction <add>, %282, %cst_117 [1] : vector<8x256xf32> to vector<8xf32>
    %284 = vector.shape_cast %283 : vector<8xf32> to vector<8x1xf32>
    %cst_118 = arith.constant dense<0.000000e+00> : vector<1xf32>
    %285 = vector.multi_reduction <add>, %284, %cst_118 [0] : vector<8x1xf32> to vector<1xf32>
    %286 = vector.shape_cast %285 : vector<1xf32> to vector<1x1xf32>
    %287 = vector.shape_cast %281 : vector<1x1xf32> to vector<1x1xf32>
    %288 = vector.broadcast %287 : vector<1x1xf32> to vector<1x512xf32>
    %289 = vector.shape_cast %286 : vector<1x1xf32> to vector<1x1xf32>
    %290 = vector.broadcast %289 : vector<1x1xf32> to vector<1x512xf32>
    %291 = arith.select %25, %288, %290 : vector<1x512xi1>, vector<1x512xf32>
    %cst_119 = arith.constant 4.8828125E-4 : f32
    %292 = vector.broadcast %cst_119 : f32 to vector<1x512xf32>
    %293 = arith.mulf %291, %292 : vector<1x512xf32>
    %cst_120 = arith.constant 9.99999974E-6 : f32
    %294 = vector.broadcast %cst_120 : f32 to vector<1x512xf32>
    %295 = arith.addf %293, %294 : vector<1x512xf32>
    %296 = math.rsqrt %295 : vector<1x512xf32>
    %297 = vector.broadcast %296 : vector<1x512xf32> to vector<8x512xf32>
    %298 = vector.broadcast %12 : vector<8x1xf32> to vector<8x512xf32>
    %299 = arith.mulf %297, %298 : vector<8x512xf32>
    %300 = arith.mulf %275, %299 : vector<8x512xf32>
    %301 = vector.broadcast %13 : vector<8x1xf32> to vector<8x512xf32>
    %302 = arith.addf %300, %301 : vector<8x512xf32>
    %cst_121 = arith.constant dense<0.000000e+00> : vector<20x512xf32>
    %303 = tpu.matmul %6, %4, %cst_121 {dimension_numbers = #tpu.dot_dimension_numbers<[1], [0], [0], [1], [0, 0, 1, 1], [], []>} : vector<20x4xf32>, vector<4x512xf32>, vector<20x512xf32> -> vector<20x512xf32>
    %304 = vector.extract_strided_slice %303 {offsets = [0, 0], sizes = [8, 512], strides = [1, 1]} : vector<20x512xf32> to vector<8x512xf32>
    %305 = arith.addf %302, %304 : vector<8x512xf32>
    %306 = vector.broadcast %14 : vector<8x1xf32> to vector<8x512xf32>
    %307 = arith.addf %305, %306 : vector<8x512xf32>
    %308 = vector.extract_strided_slice %303 {offsets = [8, 0], sizes = [12, 512], strides = [1, 1]} : vector<20x512xf32> to vector<12x512xf32>
    %309 = vector.broadcast %18 : vector<12x1xf32> to vector<12x512xf32>
    %310 = arith.addf %308, %309 : vector<12x512xf32>
    %311 = vector.extract_strided_slice %310 {offsets = [0, 0], sizes = [4, 512], strides = [1, 1]} : vector<12x512xf32> to vector<4x512xf32>
    %312 = vector.extract_strided_slice %310 {offsets = [4, 0], sizes = [4, 512], strides = [1, 1]} : vector<12x512xf32> to vector<4x512xf32>
    %313 = vector.extract_strided_slice %310 {offsets = [8, 0], sizes = [4, 512], strides = [1, 1]} : vector<12x512xf32> to vector<4x512xf32>
    %314 = vector.extract_strided_slice %312 {offsets = [0, 0], sizes = [4, 256], strides = [1, 1]} : vector<4x512xf32> to vector<4x256xf32>
    %cst_122 = arith.constant dense<0xFF800000> : vector<4xf32>
    %315 = vector.multi_reduction <maximumf>, %314, %cst_122 [1] : vector<4x256xf32> to vector<4xf32>
    %316 = vector.shape_cast %315 : vector<4xf32> to vector<4x1xf32>
    %317 = vector.extract_strided_slice %312 {offsets = [0, 256], sizes = [4, 256], strides = [1, 1]} : vector<4x512xf32> to vector<4x256xf32>
    %cst_123 = arith.constant dense<0xFF800000> : vector<4xf32>
    %318 = vector.multi_reduction <maximumf>, %317, %cst_123 [1] : vector<4x256xf32> to vector<4xf32>
    %319 = vector.shape_cast %318 : vector<4xf32> to vector<4x1xf32>
    %320 = vector.shape_cast %25 : vector<1x512xi1> to vector<1x512xi1>
    %321 = vector.broadcast %320 : vector<1x512xi1> to vector<4x512xi1>
    %322 = vector.shape_cast %316 : vector<4x1xf32> to vector<4x1xf32>
    %323 = vector.broadcast %322 : vector<4x1xf32> to vector<4x512xf32>
    %324 = vector.shape_cast %319 : vector<4x1xf32> to vector<4x1xf32>
    %325 = vector.broadcast %324 : vector<4x1xf32> to vector<4x512xf32>
    %326 = arith.select %321, %323, %325 : vector<4x512xi1>, vector<4x512xf32>
    %327 = arith.subf %312, %326 : vector<4x512xf32>
    %328 = math.exp %327 : vector<4x512xf32>
    %329 = vector.extract_strided_slice %328 {offsets = [0, 0], sizes = [4, 256], strides = [1, 1]} : vector<4x512xf32> to vector<4x256xf32>
    %cst_124 = arith.constant dense<0.000000e+00> : vector<4xf32>
    %330 = vector.multi_reduction <add>, %329, %cst_124 [1] : vector<4x256xf32> to vector<4xf32>
    %331 = vector.shape_cast %330 : vector<4xf32> to vector<4x1xf32>
    %332 = vector.extract_strided_slice %328 {offsets = [0, 256], sizes = [4, 256], strides = [1, 1]} : vector<4x512xf32> to vector<4x256xf32>
    %cst_125 = arith.constant dense<0.000000e+00> : vector<4xf32>
    %333 = vector.multi_reduction <add>, %332, %cst_125 [1] : vector<4x256xf32> to vector<4xf32>
    %334 = vector.shape_cast %333 : vector<4xf32> to vector<4x1xf32>
    %335 = vector.shape_cast %25 : vector<1x512xi1> to vector<1x512xi1>
    %336 = vector.broadcast %335 : vector<1x512xi1> to vector<4x512xi1>
    %337 = vector.shape_cast %331 : vector<4x1xf32> to vector<4x1xf32>
    %338 = vector.broadcast %337 : vector<4x1xf32> to vector<4x512xf32>
    %339 = vector.shape_cast %334 : vector<4x1xf32> to vector<4x1xf32>
    %340 = vector.broadcast %339 : vector<4x1xf32> to vector<4x512xf32>
    %341 = arith.select %336, %338, %340 : vector<4x512xi1>, vector<4x512xf32>
    %342 = tpu.reciprocal %341 : vector<4x512xf32> -> vector<4x512xf32>
    %343 = arith.mulf %328, %342 : vector<4x512xf32>
    %344 = vector.extract_strided_slice %311 {offsets = [0, 0], sizes = [4, 256], strides = [1, 1]} : vector<4x512xf32> to vector<4x256xf32>
    %345 = vector.extract_strided_slice %343 {offsets = [0, 0], sizes = [4, 256], strides = [1, 1]} : vector<4x512xf32> to vector<4x256xf32>
    %346 = vector.extract_strided_slice %313 {offsets = [0, 0], sizes = [4, 256], strides = [1, 1]} : vector<4x512xf32> to vector<4x256xf32>
    %cst_126 = arith.constant dense<0.000000e+00> : vector<4x4xf32>
    %347 = tpu.matmul %346, %345, %cst_126 {dimension_numbers = #tpu.dot_dimension_numbers<[1], [1], [0], [0], [0, 0, 1, 0], [], []>} : vector<4x256xf32>, vector<4x256xf32>, vector<4x4xf32> -> vector<4x4xf32>
    %cst_127 = arith.constant dense<0.000000e+00> : vector<4x256xf32>
    %348 = tpu.matmul %347, %344, %cst_127 {dimension_numbers = #tpu.dot_dimension_numbers<[1], [0], [0], [1], [0, 0, 1, 1], [], []>} : vector<4x4xf32>, vector<4x256xf32>, vector<4x256xf32> -> vector<4x256xf32>
    %349 = vector.extract_strided_slice %311 {offsets = [0, 256], sizes = [4, 256], strides = [1, 1]} : vector<4x512xf32> to vector<4x256xf32>
    %350 = vector.extract_strided_slice %343 {offsets = [0, 256], sizes = [4, 256], strides = [1, 1]} : vector<4x512xf32> to vector<4x256xf32>
    %351 = vector.extract_strided_slice %313 {offsets = [0, 256], sizes = [4, 256], strides = [1, 1]} : vector<4x512xf32> to vector<4x256xf32>
    %cst_128 = arith.constant dense<0.000000e+00> : vector<4x4xf32>
    %352 = tpu.matmul %351, %350, %cst_128 {dimension_numbers = #tpu.dot_dimension_numbers<[1], [1], [0], [0], [0, 0, 1, 0], [], []>} : vector<4x256xf32>, vector<4x256xf32>, vector<4x4xf32> -> vector<4x4xf32>
    %cst_129 = arith.constant dense<0.000000e+00> : vector<4x256xf32>
    %353 = tpu.matmul %352, %349, %cst_129 {dimension_numbers = #tpu.dot_dimension_numbers<[1], [0], [0], [1], [0, 0, 1, 1], [], []>} : vector<4x4xf32>, vector<4x256xf32>, vector<4x256xf32> -> vector<4x256xf32>
    %354 = tpu.concatenate %348, %353 in 1 : vector<4x256xf32>, vector<4x256xf32> -> vector<4x512xf32>
    %cst_130 = arith.constant dense<0.000000e+00> : vector<8x512xf32>
    %355 = tpu.matmul %7, %354, %cst_130 {dimension_numbers = #tpu.dot_dimension_numbers<[1], [0], [0], [1], [0, 0, 1, 1], [], []>} : vector<8x4xf32>, vector<4x512xf32>, vector<8x512xf32> -> vector<8x512xf32>
    %356 = vector.broadcast %15 : vector<8x1xf32> to vector<8x512xf32>
    %357 = arith.addf %355, %356 : vector<8x512xf32>
    %358 = vector.extract_strided_slice %357 {offsets = [0, 0], sizes = [8, 256], strides = [1, 1]} : vector<8x512xf32> to vector<8x256xf32>
    %cst_131 = arith.constant dense<0.000000e+00> : vector<8xf32>
    %359 = vector.multi_reduction <add>, %358, %cst_131 [1] : vector<8x256xf32> to vector<8xf32>
    %360 = vector.shape_cast %359 : vector<8xf32> to vector<8x1xf32>
    %cst_132 = arith.constant dense<0.000000e+00> : vector<1xf32>
    %361 = vector.multi_reduction <add>, %360, %cst_132 [0] : vector<8x1xf32> to vector<1xf32>
    %362 = vector.shape_cast %361 : vector<1xf32> to vector<1x1xf32>
    %363 = vector.extract_strided_slice %357 {offsets = [0, 256], sizes = [8, 256], strides = [1, 1]} : vector<8x512xf32> to vector<8x256xf32>
    %cst_133 = arith.constant dense<0.000000e+00> : vector<8xf32>
    %364 = vector.multi_reduction <add>, %363, %cst_133 [1] : vector<8x256xf32> to vector<8xf32>
    %365 = vector.shape_cast %364 : vector<8xf32> to vector<8x1xf32>
    %cst_134 = arith.constant dense<0.000000e+00> : vector<1xf32>
    %366 = vector.multi_reduction <add>, %365, %cst_134 [0] : vector<8x1xf32> to vector<1xf32>
    %367 = vector.shape_cast %366 : vector<1xf32> to vector<1x1xf32>
    %368 = vector.shape_cast %362 : vector<1x1xf32> to vector<1x1xf32>
    %369 = vector.broadcast %368 : vector<1x1xf32> to vector<1x512xf32>
    %370 = vector.shape_cast %367 : vector<1x1xf32> to vector<1x1xf32>
    %371 = vector.broadcast %370 : vector<1x1xf32> to vector<1x512xf32>
    %372 = arith.select %25, %369, %371 : vector<1x512xi1>, vector<1x512xf32>
    %cst_135 = arith.constant 4.8828125E-4 : f32
    %373 = vector.broadcast %cst_135 : f32 to vector<1x512xf32>
    %374 = arith.mulf %372, %373 : vector<1x512xf32>
    %375 = vector.broadcast %374 : vector<1x512xf32> to vector<8x512xf32>
    %376 = arith.subf %357, %375 : vector<8x512xf32>
    %377 = arith.mulf %376, %376 : vector<8x512xf32>
    %378 = vector.extract_strided_slice %377 {offsets = [0, 0], sizes = [8, 256], strides = [1, 1]} : vector<8x512xf32> to vector<8x256xf32>
    %cst_136 = arith.constant dense<0.000000e+00> : vector<8xf32>
    %379 = vector.multi_reduction <add>, %378, %cst_136 [1] : vector<8x256xf32> to vector<8xf32>
    %380 = vector.shape_cast %379 : vector<8xf32> to vector<8x1xf32>
    %cst_137 = arith.constant dense<0.000000e+00> : vector<1xf32>
    %381 = vector.multi_reduction <add>, %380, %cst_137 [0] : vector<8x1xf32> to vector<1xf32>
    %382 = vector.shape_cast %381 : vector<1xf32> to vector<1x1xf32>
    %383 = vector.extract_strided_slice %377 {offsets = [0, 256], sizes = [8, 256], strides = [1, 1]} : vector<8x512xf32> to vector<8x256xf32>
    %cst_138 = arith.constant dense<0.000000e+00> : vector<8xf32>
    %384 = vector.multi_reduction <add>, %383, %cst_138 [1] : vector<8x256xf32> to vector<8xf32>
    %385 = vector.shape_cast %384 : vector<8xf32> to vector<8x1xf32>
    %cst_139 = arith.constant dense<0.000000e+00> : vector<1xf32>
    %386 = vector.multi_reduction <add>, %385, %cst_139 [0] : vector<8x1xf32> to vector<1xf32>
    %387 = vector.shape_cast %386 : vector<1xf32> to vector<1x1xf32>
    %388 = vector.shape_cast %382 : vector<1x1xf32> to vector<1x1xf32>
    %389 = vector.broadcast %388 : vector<1x1xf32> to vector<1x512xf32>
    %390 = vector.shape_cast %387 : vector<1x1xf32> to vector<1x1xf32>
    %391 = vector.broadcast %390 : vector<1x1xf32> to vector<1x512xf32>
    %392 = arith.select %25, %389, %391 : vector<1x512xi1>, vector<1x512xf32>
    %cst_140 = arith.constant 4.8828125E-4 : f32
    %393 = vector.broadcast %cst_140 : f32 to vector<1x512xf32>
    %394 = arith.mulf %392, %393 : vector<1x512xf32>
    %cst_141 = arith.constant 9.99999974E-6 : f32
    %395 = vector.broadcast %cst_141 : f32 to vector<1x512xf32>
    %396 = arith.addf %394, %395 : vector<1x512xf32>
    %397 = math.rsqrt %396 : vector<1x512xf32>
    %398 = vector.broadcast %397 : vector<1x512xf32> to vector<8x512xf32>
    %399 = vector.broadcast %16 : vector<8x1xf32> to vector<8x512xf32>
    %400 = arith.mulf %398, %399 : vector<8x512xf32>
    %401 = arith.mulf %376, %400 : vector<8x512xf32>
    %402 = vector.broadcast %17 : vector<8x1xf32> to vector<8x512xf32>
    %403 = arith.addf %401, %402 : vector<8x512xf32>
    %cst_142 = arith.constant 0.000000e+00 : f32
    %404 = vector.broadcast %cst_142 : f32 to vector<8x512xf32>
    %405 = arith.maximumf %403, %404 : vector<8x512xf32>
    %406 = math.tanh %405 : vector<8x512xf32>
    %407 = arith.mulf %307, %406 : vector<8x512xf32>
    %408 = vector.extract_strided_slice %407 {offsets = [0, 0], sizes = [8, 256], strides = [1, 1]} : vector<8x512xf32> to vector<8x256xf32>
    %c0_143 = arith.constant 0 : index
    %c0_144 = arith.constant 0 : index
    %c0_145 = arith.constant 0 : index
    %409 = vector.load %arg3[%c0_143, %c0_144, %c0_145] : memref<2x8x256xf32, #tpu.memory_space<vmem>>, vector<1x8x256xf32>
    %410 = vector.shape_cast %409 : vector<1x8x256xf32> to vector<8x256xf32>
    %411 = vector.shape_cast %408 : vector<8x256xf32> to vector<1x8x256xf32>
    tpu.vector_store %arg3[%c0_143, %c0_144, %c0_145], %411 {strides = array<i32>} : memref<2x8x256xf32, #tpu.memory_space<vmem>>, vector<1x8x256xf32>,
    %412 = vector.extract_strided_slice %407 {offsets = [0, 256], sizes = [8, 256], strides = [1, 1]} : vector<8x512xf32> to vector<8x256xf32>
    %c1_146 = arith.constant 1 : index
    %c0_147 = arith.constant 0 : index
    %c0_148 = arith.constant 0 : index
    %413 = vector.load %arg3[%c1_146, %c0_147, %c0_148] : memref<2x8x256xf32, #tpu.memory_space<vmem>>, vector<1x8x256xf32>
    %414 = vector.shape_cast %413 : vector<1x8x256xf32> to vector<8x256xf32>
    %415 = vector.shape_cast %412 : vector<8x256xf32> to vector<1x8x256xf32>
    tpu.vector_store %arg3[%c1_146, %c0_147, %c0_148], %415 {strides = array<i32>} : memref<2x8x256xf32, #tpu.memory_space<vmem>>, vector<1x8x256xf32>,
    return
  }
}

</mosaic_0001>

<llo_original>
// kernel: conv_block_pallas.1
$region0: #{conv_block_pallas.1}
  #allocation0 [shape = 'u32[]', space=smem, size = 0x4, offset = 0x4, fixed_abs, tag = 'smem constant byte address 0x4 - core index']
  #allocation1 [shape = 'u32[144,128]{1,0:T(1,128)}', space=vmem, size = 0x12000, scoped, tag = 'internal scratch']
  #allocation2 [shape = 'f32[72,512]{1,0:T(8,128)}', space=vmem, size = 0x24000, scoped, tag = 'scratch operand']
  %s0 = inlined_call_operand.vmem [shape: f32[2,4,256], index: 0, kind: input, shape index: {}]
  %s1 = inlined_call_operand.vmem [shape: f32[16,72], index: 1, kind: input, shape index: {}]
  %s2 = inlined_call_operand.vmem [shape: f32[24,19], index: 2, kind: input, shape index: {}]
  %s3 = inlined_call_operand.vmem [shape: f32[2,8,256], index: 3, kind: output, shape index: {}]
  %s4 = sld [smem:[#allocation0]]
  $region22: #{conv_block_pallas.1} parent=0
    _
  %s6 = ssub.s32 1, %s4
  %s7 = scalar_select 0, %s6, %s4
  // Predicated region
  $region2: #{conv_block_pallas.1} parent=0 // pred_check
    _
  $region3: #{conv_block_pallas.1} parent=0 // pred_check_branch
    %9 = sbr.rel (0) target = $region5
  $region4: #{conv_block_pallas.1} parent=0 // pred_region
    _
  $region5: #{conv_block_pallas.1} parent=0 // pred_fallthru
    _
  // Predicated region
  $region6: #{conv_block_pallas.1} parent=0 // pred_check
    _
  $region7: #{conv_block_pallas.1} parent=0 // pred_check_branch
    %11 = sbr.rel (0) target = $region9
  $region8: #{conv_block_pallas.1} parent=0 // pred_region
    _
  $region9: #{conv_block_pallas.1} parent=0 // pred_fallthru
    _
  // Predicated region
  $region10: #{conv_block_pallas.1} parent=0 // pred_check
    _
  $region11: #{conv_block_pallas.1} parent=0 // pred_check_branch
    %13 = sbr.rel (0) target = $region13
  $region12: #{conv_block_pallas.1} parent=0 // pred_region
    _
  $region13: #{conv_block_pallas.1} parent=0 // pred_fallthru
    _
  %v14 = vld [vmem:[%s0] sm:$0xff]
  %s15 = scalar_lea.vmem %s0, 8
  %v16 = vld [vmem:[%s15] sm:$0xff]
  %v18 = vcombine.high %v14, %v14
  %v21 = vcombine.high %v16, %v16
  %v23 = vld [vmem:[%s2] sm:$0xff]
  %v24 = vld [vmem:[%s2 + $0x8] sm:$0xff]
  %v25 = vld [vmem:[%s2 + $0x10] sm:$0xff]
  %v26 = vlaneseq
  %v27 = vand.u32 %v26, 127
  %v28 = vadd.s32 %v27, 128
  %v29 = vadd.s32 %v27, 256
  %v30 = vadd.s32 %v27, 384
  %v31 = vand.u32 %v27, 255
  %v32 = vand.u32 %v28, 255
  %v33 = vand.u32 %v29, 255
  %v34 = vand.u32 %v30, 255
  %v35 = vand.u32 %v27, 15
  %v36 = vand.u32 %v28, 15
  %v37 = vand.u32 %v29, 15
  %v38 = vand.u32 %v30, 15
  %vm39 = vcmp.lt.s32.totalorder %v27, 256
  %vm40 = vcmp.lt.s32.totalorder %v28, 256
  %vm41 = vcmp.lt.s32.totalorder %v29, 256
  %vm42 = vcmp.lt.s32.totalorder %v30, 256
  %vm43 = vcmp.ge.s32.totalorder %v31, 16
  %vm44 = vcmp.ge.s32.totalorder %v32, 16
  %vm45 = vcmp.ge.s32.totalorder %v33, 16
  %vm46 = vcmp.ge.s32.totalorder %v34, 16
  %vm47 = vcmp.ge.s32.totalorder %v35, 1
  %vm48 = vcmp.ge.s32.totalorder %v36, 1
  %vm49 = vcmp.ge.s32.totalorder %v37, 1
  %vm50 = vcmp.ge.s32.totalorder %v38, 1
  %vm51 = vmand %vm43, %vm47
  %vm52 = vmand %vm44, %vm48
  %vm53 = vmand %vm45, %vm49
  %vm54 = vmand %vm46, %vm50
  %vm55 = vcmp.lt.s32.totalorder %v35, 15
  %vm56 = vcmp.lt.s32.totalorder %v36, 15
  %vm57 = vcmp.lt.s32.totalorder %v37, 15
  %vm58 = vcmp.lt.s32.totalorder %v38, 15
  %vm59 = vmand %vm43, %vm55
  %vm60 = vmand %vm44, %vm56
  %vm61 = vmand %vm45, %vm57
  %vm62 = vmand %vm46, %vm58
  %vm63 = vcmp.lt.s32.totalorder %v31, 240
  %vm64 = vcmp.lt.s32.totalorder %v32, 240
  %vm65 = vcmp.lt.s32.totalorder %v33, 240
  %vm66 = vcmp.lt.s32.totalorder %v34, 240
  %vm67 = vmand %vm63, %vm47
  %vm68 = vmand %vm64, %vm48
  %vm69 = vmand %vm65, %vm49
  %vm70 = vmand %vm66, %vm50
  %vm71 = vmand %vm63, %vm55
  %vm72 = vmand %vm64, %vm56
  %vm73 = vmand %vm65, %vm57
  %vm74 = vmand %vm66, %vm58
  %75 = vst [vmem:[#allocation2] sm:$0xff] 0.0
  %76 = vst [vmem:[#allocation2 + $0x8] sm:$0xff] 0.0
  %77 = vst [vmem:[#allocation2 + $0x10] sm:$0xff] 0.0
  %78 = vst [vmem:[#allocation2 + $0x18] sm:$0xff] 0.0
  %79 = vst [vmem:[#allocation2 + $0x20] sm:$0xff] 0.0
  %80 = vst [vmem:[#allocation2 + $0x28] sm:$0xff] 0.0
  %81 = vst [vmem:[#allocation2 + $0x30] sm:$0xff] 0.0
  %82 = vst [vmem:[#allocation2 + $0x38] sm:$0xff] 0.0
  %83 = vst [vmem:[#allocation2 + $0x40] sm:$0xff] 0.0
  %84 = vst [vmem:[#allocation2 + $0x48] sm:$0xff] 0.0
  %85 = vst [vmem:[#allocation2 + $0x50] sm:$0xff] 0.0
  %86 = vst [vmem:[#allocation2 + $0x58] sm:$0xff] 0.0
  %87 = vst [vmem:[#allocation2 + $0x60] sm:$0xff] 0.0
  %88 = vst [vmem:[#allocation2 + $0x68] sm:$0xff] 0.0
  %89 = vst [vmem:[#allocation2 + $0x70] sm:$0xff] 0.0
  %90 = vst [vmem:[#allocation2 + $0x78] sm:$0xff] 0.0
  %91 = vst [vmem:[#allocation2 + $0x80] sm:$0xff] 0.0
  %92 = vst [vmem:[#allocation2 + $0x88] sm:$0xff] 0.0
  %93 = vst [vmem:[#allocation2 + $0x90] sm:$0xff] 0.0
  %94 = vst [vmem:[#allocation2 + $0x98] sm:$0xff] 0.0
  %95 = vst [vmem:[#allocation2 + $0xa0] sm:$0xff] 0.0
  %96 = vst [vmem:[#allocation2 + $0xa8] sm:$0xff] 0.0
  %97 = vst [vmem:[#allocation2 + $0xb0] sm:$0xff] 0.0
  %98 = vst [vmem:[#allocation2 + $0xb8] sm:$0xff] 0.0
  %99 = vst [vmem:[#allocation2 + $0xc0] sm:$0xff] 0.0
  %100 = vst [vmem:[#allocation2 + $0xc8] sm:$0xff] 0.0
  %101 = vst [vmem:[#allocation2 + $0xd0] sm:$0xff] 0.0
  %102 = vst [vmem:[#allocation2 + $0xd8] sm:$0xff] 0.0
  %103 = vst [vmem:[#allocation2 + $0xe0] sm:$0xff] 0.0
  %104 = vst [vmem:[#allocation2 + $0xe8] sm:$0xff] 0.0
  %105 = vst [vmem:[#allocation2 + $0xf0] sm:$0xff] 0.0
  %106 = vst [vmem:[#allocation2 + $0xf8] sm:$0xff] 0.0
  %107 = vst [vmem:[#allocation2 + $0x100] sm:$0xff] 0.0
  %108 = vst [vmem:[#allocation2 + $0x108] sm:$0xff] 0.0
  %109 = vst [vmem:[#allocation2 + $0x110] sm:$0xff] 0.0
  %110 = vst [vmem:[#allocation2 + $0x118] sm:$0xff] 0.0
  %v111 = vld [vmem:[%s1] sm:$0xff]
  %v112 = vld [vmem:[%s1 + $0x8] sm:$0xff]
  %113 = vrot.lane.b32.xlu0 %v14, 17
  %v114 = vpop.permute.xlu0 %113
  %115 = vrot.lane.b32.xlu0 %v18, 17
  %v116 = vpop.permute.xlu0 %115
  %117 = vrot.lane.b32.xlu0 %v16, 17
  %v118 = vpop.permute.xlu0 %117
  %119 = vrot.lane.b32.xlu0 %v21, 17
  %v120 = vpop.permute.xlu0 %119
  %vm121 = vcmp.lt.s32.totalorder %v27, 17
  %v122 = vsel %vm121, %v118, %v120
  %v123 = vsel %vm121, %v116, %v118
  %v124 = vsel %vm121, %v114, %v116
  %v125 = vsel %vm121, %v120, %v114
  %v126 = vsel %vm51, 1, 0
  %v127 = vsel %vm52, 1, 0
  %v128 = vsel %vm53, 1, 0
  %v129 = vsel %vm54, 1, 0
  %vm130 = vcmp.eq.s32.totalorder %v126, 1
  %vm131 = vcmp.eq.s32.totalorder %v127, 1
  %vm132 = vcmp.eq.s32.totalorder %v128, 1
  %vm133 = vcmp.eq.s32.totalorder %v129, 1
  %v134 = vsel %vm130, %v125, 0.0
  %v135 = vsel %vm131, %v124, 0.0
  %v136 = vsel %vm132, %v123, 0.0
  %v137 = vsel %vm133, %v122, 0.0
  %138 = vst [vmem:[#allocation2] sm:$0xf] %v134
  %139 = vst [vmem:[#allocation2 + $0x8] sm:$0xf] %v135
  %140 = vst [vmem:[#allocation2 + $0x10] sm:$0xf] %v136
  %141 = vst [vmem:[#allocation2 + $0x18] sm:$0xf] %v137
  %142 = vrot.lane.b32.xlu0 %v14, 16
  %v143 = vpop.permute.xlu0 %142
  %144 = vrot.lane.b32.xlu0 %v18, 16
  %v145 = vpop.permute.xlu0 %144
  %146 = vrot.lane.b32.xlu0 %v16, 16
  %v147 = vpop.permute.xlu0 %146
  %148 = vrot.lane.b32.xlu0 %v21, 16
  %v149 = vpop.permute.xlu0 %148
  %vm150 = vcmp.lt.s32.totalorder %v27, 16
  %v151 = vsel %vm150, %v147, %v149
  %v152 = vsel %vm150, %v145, %v147
  %v153 = vsel %vm150, %v143, %v145
  %v154 = vsel %vm150, %v149, %v143
  %v155 = vsel %vm43, 1, 0
  %v156 = vsel %vm44, 1, 0
  %v157 = vsel %vm45, 1, 0
  %v158 = vsel %vm46, 1, 0
  %vm159 = vcmp.eq.s32.totalorder %v155, 1
  %vm160 = vcmp.eq.s32.totalorder %v156, 1
  %vm161 = vcmp.eq.s32.totalorder %v157, 1
  %vm162 = vcmp.eq.s32.totalorder %v158, 1
  %v163 = vsel %vm159, %v154, 0.0
  %v164 = vsel %vm160, %v153, 0.0
  %v165 = vsel %vm161, %v152, 0.0
  %v166 = vsel %vm162, %v151, 0.0
  %167 = vst [vmem:[#allocation2 + $0x20] sm:$0xf] %v163
  %168 = vst [vmem:[#allocation2 + $0x28] sm:$0xf] %v164
  %169 = vst [vmem:[#allocation2 + $0x30] sm:$0xf] %v165
  %170 = vst [vmem:[#allocation2 + $0x38] sm:$0xf] %v166
  %171 = vrot.lane.b32.xlu0 %v14, 15
  %v172 = vpop.permute.xlu0 %171
  %173 = vrot.lane.b32.xlu0 %v18, 15
  %v174 = vpop.permute.xlu0 %173
  %175 = vrot.lane.b32.xlu0 %v16, 15
  %v176 = vpop.permute.xlu0 %175
  %177 = vrot.lane.b32.xlu0 %v21, 15
  %v178 = vpop.permute.xlu0 %177
  %vm179 = vcmp.lt.s32.totalorder %v27, 15
  %v180 = vsel %vm179, %v176, %v178
  %v181 = vsel %vm179, %v174, %v176
  %v182 = vsel %vm179, %v172, %v174
  %v183 = vsel %vm179, %v178, %v172
  %v184 = vsel %vm59, 1, 0
  %v185 = vsel %vm60, 1, 0
  %v186 = vsel %vm61, 1, 0
  %v187 = vsel %vm62, 1, 0
  %vm188 = vcmp.eq.s32.totalorder %v184, 1
  %vm189 = vcmp.eq.s32.totalorder %v185, 1
  %vm190 = vcmp.eq.s32.totalorder %v186, 1
  %vm191 = vcmp.eq.s32.totalorder %v187, 1
  %v192 = vsel %vm188, %v183, 0.0
  %v193 = vsel %vm189, %v182, 0.0
  %v194 = vsel %vm190, %v181, 0.0
  %v195 = vsel %vm191, %v180, 0.0
  %196 = vst [vmem:[#allocation2 + $0x40] sm:$0xf] %v192
  %197 = vst [vmem:[#allocation2 + $0x48] sm:$0xf] %v193
  %198 = vst [vmem:[#allocation2 + $0x50] sm:$0xf] %v194
  %199 = vst [vmem:[#allocation2 + $0x58] sm:$0xf] %v195
  %200 = vrot.lane.b32.xlu0 %v14, 1
  %v201 = vpop.permute.xlu0 %200
  %202 = vrot.lane.b32.xlu0 %v18, 1
  %v203 = vpop.permute.xlu0 %202
  %204 = vrot.lane.b32.xlu0 %v16, 1
  %v205 = vpop.permute.xlu0 %204
  %206 = vrot.lane.b32.xlu0 %v21, 1
  %v207 = vpop.permute.xlu0 %206
  %vm208 = vcmp.lt.s32.totalorder %v27, 1
  %v209 = vsel %vm208, %v205, %v207
  %v210 = vsel %vm208, %v203, %v205
  %v211 = vsel %vm208, %v201, %v203
  %v212 = vsel %vm208, %v207, %v201
  %v213 = vsel %vm47, 1, 0
  %v214 = vsel %vm48, 1, 0
  %v215 = vsel %vm49, 1, 0
  %v216 = vsel %vm50, 1, 0
  %vm217 = vcmp.eq.s32.totalorder %v213, 1
  %vm218 = vcmp.eq.s32.totalorder %v214, 1
  %vm219 = vcmp.eq.s32.totalorder %v215, 1
  %vm220 = vcmp.eq.s32.totalorder %v216, 1
  %v221 = vsel %vm217, %v212, 0.0
  %v222 = vsel %vm218, %v211, 0.0
  %v223 = vsel %vm219, %v210, 0.0
  %v224 = vsel %vm220, %v209, 0.0
  %225 = vst [vmem:[#allocation2 + $0x60] sm:$0xf] %v221
  %226 = vst [vmem:[#allocation2 + $0x68] sm:$0xf] %v222
  %227 = vst [vmem:[#allocation2 + $0x70] sm:$0xf] %v223
  %228 = vst [vmem:[#allocation2 + $0x78] sm:$0xf] %v224
  %229 = vst [vmem:[#allocation2 + $0x80] sm:$0xf] %v14
  %230 = vst [vmem:[#allocation2 + $0x88] sm:$0xf] %v18
  %231 = vst [vmem:[#allocation2 + $0x90] sm:$0xf] %v16
  %232 = vst [vmem:[#allocation2 + $0x98] sm:$0xf] %v21
  %233 = vrot.lane.b32.xlu0 %v14, 127
  %v234 = vpop.permute.xlu0 %233
  %235 = vrot.lane.b32.xlu0 %v18, 127
  %v236 = vpop.permute.xlu0 %235
  %237 = vrot.lane.b32.xlu0 %v16, 127
  %v238 = vpop.permute.xlu0 %237
  %239 = vrot.lane.b32.xlu0 %v21, 127
  %v240 = vpop.permute.xlu0 %239
  %vm241 = vcmp.lt.s32.totalorder %v27, 127
  %v242 = vsel %vm241, %v238, %v240
  %v243 = vsel %vm241, %v236, %v238
  %v244 = vsel %vm241, %v234, %v236
  %v245 = vsel %vm241, %v240, %v234
  %v246 = vsel %vm55, 1, 0
  %v247 = vsel %vm56, 1, 0
  %v248 = vsel %vm57, 1, 0
  %v249 = vsel %vm58, 1, 0
  %vm250 = vcmp.eq.s32.totalorder %v246, 1
  %vm251 = vcmp.eq.s32.totalorder %v247, 1
  %vm252 = vcmp.eq.s32.totalorder %v248, 1
  %vm253 = vcmp.eq.s32.totalorder %v249, 1
  %v254 = vsel %vm250, %v244, 0.0
  %v255 = vsel %vm251, %v243, 0.0
  %v256 = vsel %vm252, %v242, 0.0
  %v257 = vsel %vm253, %v245, 0.0
  %258 = vst [vmem:[#allocation2 + $0xa0] sm:$0xf] %v254
  %259 = vst [vmem:[#allocation2 + $0xa8] sm:$0xf] %v255
  %260 = vst [vmem:[#allocation2 + $0xb0] sm:$0xf] %v256
  %261 = vst [vmem:[#allocation2 + $0xb8] sm:$0xf] %v257
  %262 = vrot.lane.b32.xlu0 %v14, 113
  %v263 = vpop.permute.xlu0 %262
  %264 = vrot.lane.b32.xlu0 %v18, 113
  %v265 = vpop.permute.xlu0 %264
  %266 = vrot.lane.b32.xlu0 %v16, 113
  %v267 = vpop.permute.xlu0 %266
  %268 = vrot.lane.b32.xlu0 %v21, 113
  %v269 = vpop.permute.xlu0 %268
  %vm270 = vcmp.lt.s32.totalorder %v27, 113
  %v271 = vsel %vm270, %v267, %v269
  %v272 = vsel %vm270, %v265, %v267
  %v273 = vsel %vm270, %v263, %v265
  %v274 = vsel %vm270, %v269, %v263
  %v275 = vsel %vm67, 1, 0
  %v276 = vsel %vm68, 1, 0
  %v277 = vsel %vm69, 1, 0
  %v278 = vsel %vm70, 1, 0
  %vm279 = vcmp.eq.s32.totalorder %v275, 1
  %vm280 = vcmp.eq.s32.totalorder %v276, 1
  %vm281 = vcmp.eq.s32.totalorder %v277, 1
  %vm282 = vcmp.eq.s32.totalorder %v278, 1
  %v283 = vsel %vm279, %v273, 0.0
  %v284 = vsel %vm280, %v272, 0.0
  %v285 = vsel %vm281, %v271, 0.0
  %v286 = vsel %vm282, %v274, 0.0
  %287 = vst [vmem:[#allocation2 + $0xc0] sm:$0xf] %v283
  %288 = vst [vmem:[#allocation2 + $0xc8] sm:$0xf] %v284
  %289 = vst [vmem:[#allocation2 + $0xd0] sm:$0xf] %v285
  %290 = vst [vmem:[#allocation2 + $0xd8] sm:$0xf] %v286
  %291 = vrot.lane.b32.xlu0 %v14, 112
  %v292 = vpop.permute.xlu0 %291
  %293 = vrot.lane.b32.xlu0 %v18, 112
  %v294 = vpop.permute.xlu0 %293
  %295 = vrot.lane.b32.xlu0 %v16, 112
  %v296 = vpop.permute.xlu0 %295
  %297 = vrot.lane.b32.xlu0 %v21, 112
  %v298 = vpop.permute.xlu0 %297
  %vm299 = vcmp.lt.s32.totalorder %v27, 112
  %v300 = vsel %vm299, %v296, %v298
  %v301 = vsel %vm299, %v294, %v296
  %v302 = vsel %vm299, %v292, %v294
  %v303 = vsel %vm299, %v298, %v292
  %v304 = vsel %vm63, 1, 0
  %v305 = vsel %vm64, 1, 0
  %v306 = vsel %vm65, 1, 0
  %v307 = vsel %vm66, 1, 0
  %vm308 = vcmp.eq.s32.totalorder %v304, 1
  %vm309 = vcmp.eq.s32.totalorder %v305, 1
  %vm310 = vcmp.eq.s32.totalorder %v306, 1
  %vm311 = vcmp.eq.s32.totalorder %v307, 1
  %v312 = vsel %vm308, %v302, 0.0
  %v313 = vsel %vm309, %v301, 0.0
  %v314 = vsel %vm310, %v300, 0.0
  %v315 = vsel %vm311, %v303, 0.0
  %316 = vst [vmem:[#allocation2 + $0xe0] sm:$0xf] %v312
  %317 = vst [vmem:[#allocation2 + $0xe8] sm:$0xf] %v313
  %318 = vst [vmem:[#allocation2 + $0xf0] sm:$0xf] %v314
  %319 = vst [vmem:[#allocation2 + $0xf8] sm:$0xf] %v315
  %320 = vrot.lane.b32.xlu0 %v14, 111
  %v321 = vpop.permute.xlu0 %320
  %322 = vrot.lane.b32.xlu0 %v18, 111
  %v323 = vpop.permute.xlu0 %322
  %324 = vrot.lane.b32.xlu0 %v16, 111
  %v325 = vpop.permute.xlu0 %324
  %326 = vrot.lane.b32.xlu0 %v21, 111
  %v327 = vpop.permute.xlu0 %326
  %vm328 = vcmp.lt.s32.totalorder %v27, 111
  %v329 = vsel %vm328, %v325, %v327
  %v330 = vsel %vm328, %v323, %v325
  %v331 = vsel %vm328, %v321, %v323
  %v332 = vsel %vm328, %v327, %v321
  %v333 = vsel %vm71, 1, 0
  %v334 = vsel %vm72, 1, 0
  %v335 = vsel %vm73, 1, 0
  %v336 = vsel %vm74, 1, 0
  %vm337 = vcmp.eq.s32.totalorder %v333, 1
  %vm338 = vcmp.eq.s32.totalorder %v334, 1
  %vm339 = vcmp.eq.s32.totalorder %v335, 1
  %vm340 = vcmp.eq.s32.totalorder %v336, 1
  %v341 = vsel %vm337, %v331, 0.0
  %v342 = vsel %vm338, %v330, 0.0
  %v343 = vsel %vm339, %v329, 0.0
  %v344 = vsel %vm340, %v332, 0.0
  %345 = vst [vmem:[#allocation2 + $0x100] sm:$0xf] %v341
  %346 = vst [vmem:[#allocation2 + $0x108] sm:$0xf] %v342
  %347 = vst [vmem:[#allocation2 + $0x110] sm:$0xf] %v343
  %348 = vst [vmem:[#allocation2 + $0x118] sm:$0xf] %v344
  %v349 = vld [vmem:[#allocation2] sm:$0xff]
  %v350 = vld [vmem:[#allocation2 + $0x8] sm:$0xff]
  %v351 = vld [vmem:[#allocation2 + $0x10] sm:$0xff]
  %v352 = vld [vmem:[#allocation2 + $0x18] sm:$0xff]
  %v353 = vld [vmem:[#allocation2 + $0x20] sm:$0xff]
  %v354 = vld [vmem:[#allocation2 + $0x28] sm:$0xff]
  %v355 = vld [vmem:[#allocation2 + $0x30] sm:$0xff]
  %v356 = vld [vmem:[#allocation2 + $0x38] sm:$0xff]
  %v357 = vld [vmem:[#allocation2 + $0x40] sm:$0xff]
  %v358 = vld [vmem:[#allocation2 + $0x48] sm:$0xff]
  %v359 = vld [vmem:[#allocation2 + $0x50] sm:$0xff]
  %v360 = vld [vmem:[#allocation2 + $0x58] sm:$0xff]
  %v361 = vld [vmem:[#allocation2 + $0x60] sm:$0xff]
  %v362 = vld [vmem:[#allocation2 + $0x68] sm:$0xff]
  %v363 = vld [vmem:[#allocation2 + $0x70] sm:$0xff]
  %v364 = vld [vmem:[#allocation2 + $0x78] sm:$0xff]
  %v365 = vld [vmem:[#allocation2 + $0x80] sm:$0xff]
  %v366 = vld [vmem:[#allocation2 + $0x88] sm:$0xff]
  %v367 = vld [vmem:[#allocation2 + $0x90] sm:$0xff]
  %v368 = vld [vmem:[#allocation2 + $0x98] sm:$0xff]
  %v369 = vld [vmem:[#allocation2 + $0xa0] sm:$0xff]
  %v370 = vld [vmem:[#allocation2 + $0xa8] sm:$0xff]
  %v371 = vld [vmem:[#allocation2 + $0xb0] sm:$0xff]
  %v372 = vld [vmem:[#allocation2 + $0xb8] sm:$0xff]
  %v373 = vld [vmem:[#allocation2 + $0xc0] sm:$0xff]
  %v374 = vld [vmem:[#allocation2 + $0xc8] sm:$0xff]
  %v375 = vld [vmem:[#allocation2 + $0xd0] sm:$0xff]
  %v376 = vld [vmem:[#allocation2 + $0xd8] sm:$0xff]
  %v377 = vld [vmem:[#allocation2 + $0xe0] sm:$0xff]
  %v378 = vld [vmem:[#allocation2 + $0xe8] sm:$0xff]
  %v379 = vld [vmem:[#allocation2 + $0xf0] sm:$0xff]
  %v380 = vld [vmem:[#allocation2 + $0xf8] sm:$0xff]
  %v381 = vld [vmem:[#allocation2 + $0x100] sm:$0xff]
  %v382 = vld [vmem:[#allocation2 + $0x108] sm:$0xff]
  %v383 = vld [vmem:[#allocation2 + $0x110] sm:$0xff]
  %v384 = vld [vmem:[#allocation2 + $0x118] sm:$0xff]
  %386 = vset.pattern.permute.xlu0 8
  %387 = vperm.xlu0 %386, %v23
  %v388 = vpop.permute.xlu0 %387
  %vm390 = vcmask 588800
  %v392 = vsel %vm390, %v111, 0
  %394 = vmatprep.subr.mxu0 %v350
  %395 = vmatpush1.msra.mxu0 %v349
  %396 = vmatprep.subr.mxu0 %v354
  %397 = vmatpush1.msra.mxu0 %v353
  %398 = vmatprep.subr.mxu0 %v358
  %399 = vmatpush1.msra.mxu0 %v357
  %400 = vmatprep.subr.mxu0 %v362
  %401 = vmatpush1.msra.mxu0 %v361
  %402 = vmatprep.subr.mxu0 %v366
  %403 = vmatpush1.msra.mxu0 %v365
  %404 = vmatprep.subr.mxu0 %v370
  %405 = vmatpush1.msra.mxu0 %v369
  %406 = vmatprep.subr.mxu0 %v374
  %407 = vmatpush1.msra.mxu0 %v373
  %408 = vmatprep.subr.mxu0 %v378
  %409 = vmatpush1.msra.mxu0 %v377
  %410 = vmatprep.subr.mxu0 %v382
  %411 = vmatpush1.msra.mxu0 %v381
  %412 = vmatprep.subr.mxu0 0.0
  %413 = vmatpush1.msra.mxu0 0.0
  %414 = vmatprep.subr.mxu0 0.0
  %415 = vmatpush1.msra.mxu0 0.0
  %416 = vmatprep.subr.mxu0 0.0
  %417 = vmatpush1.msra.mxu0 0.0
  %418 = vmatprep.subr.mxu0 0.0
  %419 = vmatpush1.msra.mxu0 0.0
  %420 = vmatprep.subr.mxu0 0.0
  %421 = vmatpush1.msra.mxu0 0.0
  %422 = vmatprep.subr.mxu0 0.0
  %423 = vmatpush1.msra.mxu0 0.0
  %424 = vmatprep.subr.mxu0 0.0
  %425 = vmatpush1.msra.mxu0 0.0
  %426 = vmatprep.subr.mxu0 0.0
  %427 = vmatpush1.msra.mxu0 0.0
  %428 = vmatprep.subr.mxu0 0.0
  %429 = vmatpush1.msra.mxu0 0.0
  %430 = vmatprep.subr.mxu0 0.0
  %431 = vmatpush1.msra.mxu0 0.0
  %432 = vmatprep.subr.mxu0 0.0
  %433 = vmatpush1.msra.mxu0 0.0
  %434 = vmatprep.subr.mxu0 0.0
  %435 = vmatpush1.msra.mxu0 0.0
  %436 = vmatprep.subr.mxu0 0.0
  %437 = vmatpush1.msra.mxu0 0.0
  %438 = vmatprep.subr.mxu0 0.0
  %439 = vmatpush1.msra.mxu0 0.0
  %440 = vmatprep.subr.mxu0 0.0
  %441 = vmatpush1.msra.mxu0 0.0
  %442 = vmatprep.subr.mxu0 0.0
  %443 = vmatpush1.msra.mxu0 0.0
  %444 = vmatprep.subr.mxu0 0.0
  %445 = vmatpush1.msra.mxu0 0.0
  %446 = vmatprep.subr.mxu0 0.0
  %447 = vmatpush1.msra.mxu0 0.0
  %448 = vmatprep.subr.mxu0 0.0
  %449 = vmatpush1.msra.mxu0 0.0
  %450 = vmatprep.subr.mxu0 0.0
  %451 = vmatpush1.msra.mxu0 0.0
  %452 = vmatprep.subr.mxu0 0.0
  %453 = vmatpush1.msra.mxu0 0.0
  %454 = vmatprep.subr.mxu0 0.0
  %455 = vmatpush1.msra.mxu0 0.0
  %456 = vmatprep.subr.mxu0 0.0
  %457 = vmatpush1.msra.mxu0 0.0
  %458 = vmatprep.mubr.f32.mxu0 0.0
  %459 = vmatmul.mubr.f32.gmra.mrb[0].mxu0 %v392
  %v460 = vpop.f32.mrb[0].mxu0
  %v461 = vadd.f32 %v388, %v460
  %v462 = vpop.f32.mrb[0].mxu0
  %v463 = vadd.f32 %v388, %v462
  %464 = vdwg.mxu0
  %465 = vmatprep.subr.mxu0 %v352
  %466 = vmatpush1.msra.mxu0 %v351
  %467 = vmatprep.subr.mxu0 %v356
  %468 = vmatpush1.msra.mxu0 %v355
  %469 = vmatprep.subr.mxu0 %v360
  %470 = vmatpush1.msra.mxu0 %v359
  %471 = vmatprep.subr.mxu0 %v364
  %472 = vmatpush1.msra.mxu0 %v363
  %473 = vmatprep.subr.mxu0 %v368
  %474 = vmatpush1.msra.mxu0 %v367
  %475 = vmatprep.subr.mxu0 %v372
  %476 = vmatpush1.msra.mxu0 %v371
  %477 = vmatprep.subr.mxu0 %v376
  %478 = vmatpush1.msra.mxu0 %v375
  %479 = vmatprep.subr.mxu0 %v380
  %480 = vmatpush1.msra.mxu0 %v379
  %481 = vmatprep.subr.mxu0 %v384
  %482 = vmatpush1.msra.mxu0 %v383
  %483 = vmatprep.subr.mxu0 0.0
  %484 = vmatpush1.msra.mxu0 0.0
  %485 = vmatprep.subr.mxu0 0.0
  %486 = vmatpush1.msra.mxu0 0.0
  %487 = vmatprep.subr.mxu0 0.0
  %488 = vmatpush1.msra.mxu0 0.0
  %489 = vmatprep.subr.mxu0 0.0
  %490 = vmatpush1.msra.mxu0 0.0
  %491 = vmatprep.subr.mxu0 0.0
  %492 = vmatpush1.msra.mxu0 0.0
  %493 = vmatprep.subr.mxu0 0.0
  %494 = vmatpush1.msra.mxu0 0.0
  %495 = vmatprep.subr.mxu0 0.0
  %496 = vmatpush1.msra.mxu0 0.0
  %497 = vmatprep.subr.mxu0 0.0
  %498 = vmatpush1.msra.mxu0 0.0
  %499 = vmatprep.subr.mxu0 0.0
  %500 = vmatpush1.msra.mxu0 0.0
  %501 = vmatprep.subr.mxu0 0.0
  %502 = vmatpush1.msra.mxu0 0.0
  %503 = vmatprep.subr.mxu0 0.0
  %504 = vmatpush1.msra.mxu0 0.0
  %505 = vmatprep.subr.mxu0 0.0
  %506 = vmatpush1.msra.mxu0 0.0
  %507 = vmatprep.subr.mxu0 0.0
  %508 = vmatpush1.msra.mxu0 0.0
  %509 = vmatprep.subr.mxu0 0.0
  %510 = vmatpush1.msra.mxu0 0.0
  %511 = vmatprep.subr.mxu0 0.0
  %512 = vmatpush1.msra.mxu0 0.0
  %513 = vmatprep.subr.mxu0 0.0
  %514 = vmatpush1.msra.mxu0 0.0
  %515 = vmatprep.subr.mxu0 0.0
  %516 = vmatpush1.msra.mxu0 0.0
  %517 = vmatprep.subr.mxu0 0.0
  %518 = vmatpush1.msra.mxu0 0.0
  %519 = vmatprep.subr.mxu0 0.0
  %520 = vmatpush1.msra.mxu0 0.0
  %521 = vmatprep.subr.mxu0 0.0
  %522 = vmatpush1.msra.mxu0 0.0
  %523 = vmatprep.subr.mxu0 0.0
  %524 = vmatpush1.msra.mxu0 0.0
  %525 = vmatprep.subr.mxu0 0.0
  %526 = vmatpush1.msra.mxu0 0.0
  %527 = vmatprep.subr.mxu0 0.0
  %528 = vmatpush1.msra.mxu0 0.0
  %529 = vmatprep.mubr.f32.mxu0 0.0
  %530 = vmatmul.mubr.f32.gmra.mrb[0].mxu0 %v392
  %v531 = vpop.f32.mrb[0].mxu0
  %v532 = vadd.f32 %v388, %v531
  %v533 = vpop.f32.mrb[0].mxu0
  %v534 = vadd.f32 %v388, %v533
  %535 = vdwg.mxu0
  %v536 = vadd.f32 %v461, %v463
  %537 = vadd.xlane.f32.xlu0 %v536
  %v538 = vpop.xlane.xlu0 %537
  %v539 = vrot.slane %v538, 4
  %v540 = vadd.f32 %v538, %v539
  %v541 = vrot.slane %v540, 2
  %v542 = vadd.f32 %v540, %v541
  %v543 = vrot.slane %v542, 1
  %v544 = vadd.f32 %v542, %v543
  %v545 = vadd.f32 %v532, %v534
  %546 = vadd.xlane.f32.xlu0 %v545
  %v547 = vpop.xlane.xlu0 %546
  %v548 = vrot.slane %v547, 4
  %v549 = vadd.f32 %v547, %v548
  %v550 = vrot.slane %v549, 2
  %v551 = vadd.f32 %v549, %v550
  %v552 = vrot.slane %v551, 1
  %v553 = vadd.f32 %v551, %v552
  %v554 = vsel %vm39, %v544, %v553
  %v555 = vsel %vm40, %v544, %v553
  %v556 = vsel %vm41, %v544, %v553
  %v557 = vsel %vm42, %v544, %v553
  %v558 = vmul.f32 %v554, 0.00048828125
  %v559 = vmul.f32 %v555, 0.00048828125
  %v560 = vmul.f32 %v556, 0.00048828125
  %v561 = vmul.f32 %v557, 0.00048828125
  %v562 = vsub.f32 %v461, %v558
  %v563 = vsub.f32 %v463, %v559
  %v564 = vsub.f32 %v532, %v560
  %v565 = vsub.f32 %v534, %v561
  %v566 = vmul.f32 %v562, %v562
  %v567 = vmul.f32 %v563, %v563
  %v568 = vmul.f32 %v564, %v564
  %v569 = vmul.f32 %v565, %v565
  %v570 = vadd.f32 %v566, %v567
  %571 = vadd.xlane.f32.xlu0 %v570
  %v572 = vpop.xlane.xlu0 %571
  %v573 = vrot.slane %v572, 4
  %v574 = vadd.f32 %v572, %v573
  %v575 = vrot.slane %v574, 2
  %v576 = vadd.f32 %v574, %v575
  %v577 = vrot.slane %v576, 1
  %v578 = vadd.f32 %v576, %v577
  %v579 = vadd.f32 %v568, %v569
  %580 = vadd.xlane.f32.xlu0 %v579
  %v581 = vpop.xlane.xlu0 %580
  %v582 = vrot.slane %v581, 4
  %v583 = vadd.f32 %v581, %v582
  %v584 = vrot.slane %v583, 2
  %v585 = vadd.f32 %v583, %v584
  %v586 = vrot.slane %v585, 1
  %v587 = vadd.f32 %v585, %v586
  %v588 = vsel %vm39, %v578, %v587
  %v589 = vsel %vm40, %v578, %v587
  %v590 = vsel %vm41, %v578, %v587
  %v591 = vsel %vm42, %v578, %v587
  %v592 = vmul.f32 %v588, 0.00048828125
  %v593 = vmul.f32 %v589, 0.00048828125
  %v594 = vmul.f32 %v590, 0.00048828125
  %v595 = vmul.f32 %v591, 0.00048828125
  %v596 = vadd.f32 %v592, 1e-05
  %v597 = vadd.f32 %v593, 1e-05
  %v598 = vadd.f32 %v594, 1e-05
  %v599 = vadd.f32 %v595, 1e-05
  %v600 = vrsqrt.pop %v596
  %v601 = vrsqrt.pop %v597
  %v602 = vrsqrt.pop %v598
  %v603 = vrsqrt.pop %v599
  %604 = vset.pattern.permute.xlu0 9
  %605 = vperm.xlu0 %604, %v23
  %v606 = vpop.permute.xlu0 %605
  %v608 = vmul.f32 %v600, %v606
  %v609 = vmul.f32 %v601, %v606
  %v610 = vmul.f32 %v602, %v606
  %v611 = vmul.f32 %v603, %v606
  %v612 = vmul.f32 %v562, %v608
  %v613 = vmul.f32 %v563, %v609
  %v614 = vmul.f32 %v564, %v610
  %v615 = vmul.f32 %v565, %v611
  %616 = vset.pattern.permute.xlu0 10
  %617 = vperm.xlu0 %616, %v23
  %v618 = vpop.permute.xlu0 %617
  %v620 = vadd.f32 %v612, %v618
  %v621 = vadd.f32 %v613, %v618
  %v622 = vadd.f32 %v614, %v618
  %v623 = vadd.f32 %v615, %v618
  %v624 = vmul.f32 %v620, 0.5
  %v625 = vmul.f32 %v621, 0.5
  %v626 = vmul.f32 %v622, 0.5
  %v627 = vmul.f32 %v623, 0.5
  %v628 = vmul.f32 %v620, 0.70710677
  %v629 = vmul.f32 %v621, 0.70710677
  %v630 = vmul.f32 %v622, 0.70710677
  %v631 = vmul.f32 %v623, 0.70710677
  %v632 = vmax.f32 %v628, -3.832507
  %v633 = vmax.f32 %v629, -3.832507
  %v634 = vmax.f32 %v630, -3.832507
  %v635 = vmax.f32 %v631, -3.832507
  %v636 = vmin.f32 %v632, 3.832507
  %v637 = vmin.f32 %v633, 3.832507
  %v638 = vmin.f32 %v634, 3.832507
  %v639 = vmin.f32 %v635, 3.832507
  %v640 = vmul.f32 %v636, %v636
  %v641 = vmul.f32 %v637, %v637
  %v642 = vmul.f32 %v638, %v638
  %v643 = vmul.f32 %v639, %v639
  %v644 = vmul.f32 %v640, 0.00022905065
  %v645 = vmul.f32 %v641, 0.00022905065
  %v646 = vmul.f32 %v642, 0.00022905065
  %v647 = vmul.f32 %v643, 0.00022905065
  %v648 = vadd.f32 %v644, 0.003408291
  %v649 = vadd.f32 %v645, 0.003408291
  %v650 = vadd.f32 %v646, 0.003408291
  %v651 = vadd.f32 %v647, 0.003408291
  %v652 = vmul.f32 %v648, %v640
  %v653 = vmul.f32 %v649, %v641
  %v654 = vmul.f32 %v650, %v642
  %v655 = vmul.f32 %v651, %v643
  %v656 = vadd.f32 %v652, 0.050955694
  %v657 = vadd.f32 %v653, 0.050955694
  %v658 = vadd.f32 %v654, 0.050955694
  %v659 = vadd.f32 %v655, 0.050955694
  %v660 = vmul.f32 %v656, %v640
  %v661 = vmul.f32 %v657, %v641
  %v662 = vmul.f32 %v658, %v642
  %v663 = vmul.f32 %v659, %v643
  %v664 = vadd.f32 %v660, 0.18520832
  %v665 = vadd.f32 %v661, 0.18520832
  %v666 = vadd.f32 %v662, 0.18520832
  %v667 = vadd.f32 %v663, 0.18520832
  %v668 = vmul.f32 %v664, %v640
  %v669 = vmul.f32 %v665, %v641
  %v670 = vmul.f32 %v666, %v642
  %v671 = vmul.f32 %v667, %v643
  %v672 = vadd.f32 %v668, 1.1283791
  %v673 = vadd.f32 %v669, 1.1283791
  %v674 = vadd.f32 %v670, 1.1283791
  %v675 = vadd.f32 %v671, 1.1283791
  %v676 = vmul.f32 %v640, -1.1791603e-07
  %v677 = vmul.f32 %v641, -1.1791603e-07
  %v678 = vmul.f32 %v642, -1.1791603e-07
  %v679 = vmul.f32 %v643, -1.1791603e-07
  %v680 = vadd.f32 %v676, 2.3547966e-05
  %v681 = vadd.f32 %v677, 2.3547966e-05
  %v682 = vadd.f32 %v678, 2.3547966e-05
  %v683 = vadd.f32 %v679, 2.3547966e-05
  %v684 = vmul.f32 %v680, %v640
  %v685 = vmul.f32 %v681, %v641
  %v686 = vmul.f32 %v682, %v642
  %v687 = vmul.f32 %v683, %v643
  %v688 = vadd.f32 %v684, 0.0010179626
  %v689 = vadd.f32 %v685, 0.0010179626
  %v690 = vadd.f32 %v686, 0.0010179626
  %v691 = vadd.f32 %v687, 0.0010179626
  %v692 = vmul.f32 %v688, %v640
  %v693 = vmul.f32 %v689, %v641
  %v694 = vmul.f32 %v690, %v642
  %v695 = vmul.f32 %v691, %v643
  %v696 = vadd.f32 %v692, 0.01407047
  %v697 = vadd.f32 %v693, 0.01407047
  %v698 = vadd.f32 %v694, 0.01407047
  %v699 = vadd.f32 %v695, 0.01407047
  %v700 = vmul.f32 %v696, %v640
  %v701 = vmul.f32 %v697, %v641
  %v702 = vmul.f32 %v698, %v642
  %v703 = vmul.f32 %v699, %v643
  %v704 = vadd.f32 %v700, 0.11098505
  %v705 = vadd.f32 %v701, 0.11098505
  %v706 = vadd.f32 %v702, 0.11098505
  %v707 = vadd.f32 %v703, 0.11098505
  %v708 = vmul.f32 %v704, %v640
  %v709 = vmul.f32 %v705, %v641
  %v710 = vmul.f32 %v706, %v642
  %v711 = vmul.f32 %v707, %v643
  %v712 = vadd.f32 %v708, 0.49746925
  %v713 = vadd.f32 %v709, 0.49746925
  %v714 = vadd.f32 %v710, 0.49746925
  %v715 = vadd.f32 %v711, 0.49746925
  %v716 = vmul.f32 %v712, %v640
  %v717 = vmul.f32 %v713, %v641
  %v718 = vmul.f32 %v714, %v642
  %v719 = vmul.f32 %v715, %v643
  %v720 = vadd.f32 %v716, 1.0
  %v721 = vadd.f32 %v717, 1.0
  %v722 = vadd.f32 %v718, 1.0
  %v723 = vadd.f32 %v719, 1.0
  %v724 = vmul.f32 %v636, %v672
  %v725 = vmul.f32 %v637, %v673
  %v726 = vmul.f32 %v638, %v674
  %v727 = vmul.f32 %v639, %v675
  %v728 = vrcp.pop %v720
  %v729 = vrcp.pop %v721
  %v730 = vrcp.pop %v722
  %v731 = vrcp.pop %v723
  %v732 = vmul.f32 %v724, %v728
  %v733 = vmul.f32 %v725, %v729
  %v734 = vmul.f32 %v726, %v730
  %v735 = vmul.f32 %v727, %v731
  %v736 = vadd.f32 %v732, 1.0
  %v737 = vadd.f32 %v733, 1.0
  %v738 = vadd.f32 %v734, 1.0
  %v739 = vadd.f32 %v735, 1.0
  %v740 = vmul.f32 %v624, %v736
  %v741 = vmul.f32 %v625, %v737
  %v742 = vmul.f32 %v626, %v738
  %v743 = vmul.f32 %v627, %v739
  %744 = vrot.lane.b32.xlu0 %v740, 17
  %v745 = vpop.permute.xlu0 %744
  %746 = vrot.lane.b32.xlu0 %v741, 17
  %v747 = vpop.permute.xlu0 %746
  %748 = vrot.lane.b32.xlu0 %v742, 17
  %v749 = vpop.permute.xlu0 %748
  %750 = vrot.lane.b32.xlu0 %v743, 17
  %v751 = vpop.permute.xlu0 %750
  %v752 = vsel %vm121, %v749, %v751
  %v753 = vsel %vm121, %v747, %v749
  %v754 = vsel %vm121, %v745, %v747
  %v755 = vsel %vm121, %v751, %v745
  %v756 = vsel %vm130, %v755, 0.0
  %v757 = vsel %vm131, %v754, 0.0
  %v758 = vsel %vm132, %v753, 0.0
  %v759 = vsel %vm133, %v752, 0.0
  %760 = vst [vmem:[#allocation2] sm:$0xff] %v756
  %761 = vst [vmem:[#allocation2 + $0x8] sm:$0xff] %v757
  %762 = vst [vmem:[#allocation2 + $0x10] sm:$0xff] %v758
  %763 = vst [vmem:[#allocation2 + $0x18] sm:$0xff] %v759
  %764 = vrot.lane.b32.xlu0 %v740, 16
  %v765 = vpop.permute.xlu0 %764
  %766 = vrot.lane.b32.xlu0 %v741, 16
  %v767 = vpop.permute.xlu0 %766
  %768 = vrot.lane.b32.xlu0 %v742, 16
  %v769 = vpop.permute.xlu0 %768
  %770 = vrot.lane.b32.xlu0 %v743, 16
  %v771 = vpop.permute.xlu0 %770
  %v772 = vsel %vm150, %v769, %v771
  %v773 = vsel %vm150, %v767, %v769
  %v774 = vsel %vm150, %v765, %v767
  %v775 = vsel %vm150, %v771, %v765
  %v776 = vsel %vm159, %v775, 0.0
  %v777 = vsel %vm160, %v774, 0.0
  %v778 = vsel %vm161, %v773, 0.0
  %v779 = vsel %vm162, %v772, 0.0
  %780 = vst [vmem:[#allocation2 + $0x20] sm:$0xff] %v776
  %781 = vst [vmem:[#allocation2 + $0x28] sm:$0xff] %v777
  %782 = vst [vmem:[#allocation2 + $0x30] sm:$0xff] %v778
  %783 = vst [vmem:[#allocation2 + $0x38] sm:$0xff] %v779
  %784 = vrot.lane.b32.xlu0 %v740, 15
  %v785 = vpop.permute.xlu0 %784
  %786 = vrot.lane.b32.xlu0 %v741, 15
  %v787 = vpop.permute.xlu0 %786
  %788 = vrot.lane.b32.xlu0 %v742, 15
  %v789 = vpop.permute.xlu0 %788
  %790 = vrot.lane.b32.xlu0 %v743, 15
  %v791 = vpop.permute.xlu0 %790
  %v792 = vsel %vm179, %v789, %v791
  %v793 = vsel %vm179, %v787, %v789
  %v794 = vsel %vm179, %v785, %v787
  %v795 = vsel %vm179, %v791, %v785
  %v796 = vsel %vm188, %v795, 0.0
  %v797 = vsel %vm189, %v794, 0.0
  %v798 = vsel %vm190, %v793, 0.0
  %v799 = vsel %vm191, %v792, 0.0
  %800 = vst [vmem:[#allocation2 + $0x40] sm:$0xff] %v796
  %801 = vst [vmem:[#allocation2 + $0x48] sm:$0xff] %v797
  %802 = vst [vmem:[#allocation2 + $0x50] sm:$0xff] %v798
  %803 = vst [vmem:[#allocation2 + $0x58] sm:$0xff] %v799
  %804 = vrot.lane.b32.xlu0 %v740, 1
  %v805 = vpop.permute.xlu0 %804
  %806 = vrot.lane.b32.xlu0 %v741, 1
  %v807 = vpop.permute.xlu0 %806
  %808 = vrot.lane.b32.xlu0 %v742, 1
  %v809 = vpop.permute.xlu0 %808
  %810 = vrot.lane.b32.xlu0 %v743, 1
  %v811 = vpop.permute.xlu0 %810
  %v812 = vsel %vm208, %v809, %v811
  %v813 = vsel %vm208, %v807, %v809
  %v814 = vsel %vm208, %v805, %v807
  %v815 = vsel %vm208, %v811, %v805
  %v816 = vsel %vm217, %v815, 0.0
  %v817 = vsel %vm218, %v814, 0.0
  %v818 = vsel %vm219, %v813, 0.0
  %v819 = vsel %vm220, %v812, 0.0
  %820 = vst [vmem:[#allocation2 + $0x60] sm:$0xff] %v816
  %821 = vst [vmem:[#allocation2 + $0x68] sm:$0xff] %v817
  %822 = vst [vmem:[#allocation2 + $0x70] sm:$0xff] %v818
  %823 = vst [vmem:[#allocation2 + $0x78] sm:$0xff] %v819
  %824 = vst [vmem:[#allocation2 + $0x80] sm:$0xff] %v740
  %825 = vst [vmem:[#allocation2 + $0x88] sm:$0xff] %v741
  %826 = vst [vmem:[#allocation2 + $0x90] sm:$0xff] %v742
  %827 = vst [vmem:[#allocation2 + $0x98] sm:$0xff] %v743
  %828 = vrot.lane.b32.xlu0 %v740, 127
  %v829 = vpop.permute.xlu0 %828
  %830 = vrot.lane.b32.xlu0 %v741, 127
  %v831 = vpop.permute.xlu0 %830
  %832 = vrot.lane.b32.xlu0 %v742, 127
  %v833 = vpop.permute.xlu0 %832
  %834 = vrot.lane.b32.xlu0 %v743, 127
  %v835 = vpop.permute.xlu0 %834
  %v836 = vsel %vm241, %v833, %v835
  %v837 = vsel %vm241, %v831, %v833
  %v838 = vsel %vm241, %v829, %v831
  %v839 = vsel %vm241, %v835, %v829
  %v840 = vsel %vm250, %v838, 0.0
  %v841 = vsel %vm251, %v837, 0.0
  %v842 = vsel %vm252, %v836, 0.0
  %v843 = vsel %vm253, %v839, 0.0
  %844 = vst [vmem:[#allocation2 + $0xa0] sm:$0xff] %v840
  %845 = vst [vmem:[#allocation2 + $0xa8] sm:$0xff] %v841
  %846 = vst [vmem:[#allocation2 + $0xb0] sm:$0xff] %v842
  %847 = vst [vmem:[#allocation2 + $0xb8] sm:$0xff] %v843
  %848 = vrot.lane.b32.xlu0 %v740, 113
  %v849 = vpop.permute.xlu0 %848
  %850 = vrot.lane.b32.xlu0 %v741, 113
  %v851 = vpop.permute.xlu0 %850
  %852 = vrot.lane.b32.xlu0 %v742, 113
  %v853 = vpop.permute.xlu0 %852
  %854 = vrot.lane.b32.xlu0 %v743, 113
  %v855 = vpop.permute.xlu0 %854
  %v856 = vsel %vm270, %v853, %v855
  %v857 = vsel %vm270, %v851, %v853
  %v858 = vsel %vm270, %v849, %v851
  %v859 = vsel %vm270, %v855, %v849
  %v860 = vsel %vm279, %v858, 0.0
  %v861 = vsel %vm280, %v857, 0.0
  %v862 = vsel %vm281, %v856, 0.0
  %v863 = vsel %vm282, %v859, 0.0
  %864 = vst [vmem:[#allocation2 + $0xc0] sm:$0xff] %v860
  %865 = vst [vmem:[#allocation2 + $0xc8] sm:$0xff] %v861
  %866 = vst [vmem:[#allocation2 + $0xd0] sm:$0xff] %v862
  %867 = vst [vmem:[#allocation2 + $0xd8] sm:$0xff] %v863
  %868 = vrot.lane.b32.xlu0 %v740, 112
  %v869 = vpop.permute.xlu0 %868
  %870 = vrot.lane.b32.xlu0 %v741, 112
  %v871 = vpop.permute.xlu0 %870
  %872 = vrot.lane.b32.xlu0 %v742, 112
  %v873 = vpop.permute.xlu0 %872
  %874 = vrot.lane.b32.xlu0 %v743, 112
  %v875 = vpop.permute.xlu0 %874
  %v876 = vsel %vm299, %v873, %v875
  %v877 = vsel %vm299, %v871, %v873
  %v878 = vsel %vm299, %v869, %v871
  %v879 = vsel %vm299, %v875, %v869
  %v880 = vsel %vm308, %v878, 0.0
  %v881 = vsel %vm309, %v877, 0.0
  %v882 = vsel %vm310, %v876, 0.0
  %v883 = vsel %vm311, %v879, 0.0
  %884 = vst [vmem:[#allocation2 + $0xe0] sm:$0xff] %v880
  %885 = vst [vmem:[#allocation2 + $0xe8] sm:$0xff] %v881
  %886 = vst [vmem:[#allocation2 + $0xf0] sm:$0xff] %v882
  %887 = vst [vmem:[#allocation2 + $0xf8] sm:$0xff] %v883
  %888 = vrot.lane.b32.xlu0 %v740, 111
  %v889 = vpop.permute.xlu0 %888
  %890 = vrot.lane.b32.xlu0 %v741, 111
  %v891 = vpop.permute.xlu0 %890
  %892 = vrot.lane.b32.xlu0 %v742, 111
  %v893 = vpop.permute.xlu0 %892
  %894 = vrot.lane.b32.xlu0 %v743, 111
  %v895 = vpop.permute.xlu0 %894
  %v896 = vsel %vm328, %v893, %v895
  %v897 = vsel %vm328, %v891, %v893
  %v898 = vsel %vm328, %v889, %v891
  %v899 = vsel %vm328, %v895, %v889
  %v900 = vsel %vm337, %v898, 0.0
  %v901 = vsel %vm338, %v897, 0.0
  %v902 = vsel %vm339, %v896, 0.0
  %v903 = vsel %vm340, %v899, 0.0
  %904 = vst [vmem:[#allocation2 + $0x100] sm:$0xff] %v900
  %905 = vst [vmem:[#allocation2 + $0x108] sm:$0xff] %v901
  %906 = vst [vmem:[#allocation2 + $0x110] sm:$0xff] %v902
  %907 = vst [vmem:[#allocation2 + $0x118] sm:$0xff] %v903
  %v908 = vld [vmem:[#allocation2] sm:$0xff]
  %v909 = vld [vmem:[#allocation2 + $0x8] sm:$0xff]
  %v910 = vld [vmem:[#allocation2 + $0x10] sm:$0xff]
  %v911 = vld [vmem:[#allocation2 + $0x18] sm:$0xff]
  %v912 = vld [vmem:[#allocation2 + $0x20] sm:$0xff]
  %v913 = vld [vmem:[#allocation2 + $0x28] sm:$0xff]
  %v914 = vld [vmem:[#allocation2 + $0x30] sm:$0xff]
  %v915 = vld [vmem:[#allocation2 + $0x38] sm:$0xff]
  %v916 = vld [vmem:[#allocation2 + $0x40] sm:$0xff]
  %v917 = vld [vmem:[#allocation2 + $0x48] sm:$0xff]
  %v918 = vld [vmem:[#allocation2 + $0x50] sm:$0xff]
  %v919 = vld [vmem:[#allocation2 + $0x58] sm:$0xff]
  %v920 = vld [vmem:[#allocation2 + $0x60] sm:$0xff]
  %v921 = vld [vmem:[#allocation2 + $0x68] sm:$0xff]
  %v922 = vld [vmem:[#allocation2 + $0x70] sm:$0xff]
  %v923 = vld [vmem:[#allocation2 + $0x78] sm:$0xff]
  %v924 = vld [vmem:[#allocation2 + $0x80] sm:$0xff]
  %v925 = vld [vmem:[#allocation2 + $0x88] sm:$0xff]
  %v926 = vld [vmem:[#allocation2 + $0x90] sm:$0xff]
  %v927 = vld [vmem:[#allocation2 + $0x98] sm:$0xff]
  %v928 = vld [vmem:[#allocation2 + $0xa0] sm:$0xff]
  %v929 = vld [vmem:[#allocation2 + $0xa8] sm:$0xff]
  %v930 = vld [vmem:[#allocation2 + $0xb0] sm:$0xff]
  %v931 = vld [vmem:[#allocation2 + $0xb8] sm:$0xff]
  %v932 = vld [vmem:[#allocation2 + $0xc0] sm:$0xff]
  %v933 = vld [vmem:[#allocation2 + $0xc8] sm:$0xff]
  %v934 = vld [vmem:[#allocation2 + $0xd0] sm:$0xff]
  %v935 = vld [vmem:[#allocation2 + $0xd8] sm:$0xff]
  %v936 = vld [vmem:[#allocation2 + $0xe0] sm:$0xff]
  %v937 = vld [vmem:[#allocation2 + $0xe8] sm:$0xff]
  %v938 = vld [vmem:[#allocation2 + $0xf0] sm:$0xff]
  %v939 = vld [vmem:[#allocation2 + $0xf8] sm:$0xff]
  %v940 = vld [vmem:[#allocation2 + $0x100] sm:$0xff]
  %v941 = vld [vmem:[#allocation2 + $0x108] sm:$0xff]
  %v942 = vld [vmem:[#allocation2 + $0x110] sm:$0xff]
  %v943 = vld [vmem:[#allocation2 + $0x118] sm:$0xff]
  %944 = vset.pattern.permute.xlu0 11
  %945 = vperm.xlu0 %944, %v23
  %v946 = vpop.permute.xlu0 %945
  %v949 = vsel %vm390, %v112, 0
  %951 = vmatprep.subr.mxu0 %v909
  %952 = vmatpush1.msra.mxu0 %v908
  %953 = vmatprep.subr.mxu0 %v913
  %954 = vmatpush1.msra.mxu0 %v912
  %955 = vmatprep.subr.mxu0 %v917
  %956 = vmatpush1.msra.mxu0 %v916
  %957 = vmatprep.subr.mxu0 %v921
  %958 = vmatpush1.msra.mxu0 %v920
  %959 = vmatprep.subr.mxu0 %v925
  %960 = vmatpush1.msra.mxu0 %v924
  %961 = vmatprep.subr.mxu0 %v929
  %962 = vmatpush1.msra.mxu0 %v928
  %963 = vmatprep.subr.mxu0 %v933
  %964 = vmatpush1.msra.mxu0 %v932
  %965 = vmatprep.subr.mxu0 %v937
  %966 = vmatpush1.msra.mxu0 %v936
  %967 = vmatprep.subr.mxu0 %v941
  %968 = vmatpush1.msra.mxu0 %v940
  %969 = vmatprep.subr.mxu0 0.0
  %970 = vmatpush1.msra.mxu0 0.0
  %971 = vmatprep.subr.mxu0 0.0
  %972 = vmatpush1.msra.mxu0 0.0
  %973 = vmatprep.subr.mxu0 0.0
  %974 = vmatpush1.msra.mxu0 0.0
  %975 = vmatprep.subr.mxu0 0.0
  %976 = vmatpush1.msra.mxu0 0.0
  %977 = vmatprep.subr.mxu0 0.0
  %978 = vmatpush1.msra.mxu0 0.0
  %979 = vmatprep.subr.mxu0 0.0
  %980 = vmatpush1.msra.mxu0 0.0
  %981 = vmatprep.subr.mxu0 0.0
  %982 = vmatpush1.msra.mxu0 0.0
  %983 = vmatprep.subr.mxu0 0.0
  %984 = vmatpush1.msra.mxu0 0.0
  %985 = vmatprep.subr.mxu0 0.0
  %986 = vmatpush1.msra.mxu0 0.0
  %987 = vmatprep.subr.mxu0 0.0
  %988 = vmatpush1.msra.mxu0 0.0
  %989 = vmatprep.subr.mxu0 0.0
  %990 = vmatpush1.msra.mxu0 0.0
  %991 = vmatprep.subr.mxu0 0.0
  %992 = vmatpush1.msra.mxu0 0.0
  %993 = vmatprep.subr.mxu0 0.0
  %994 = vmatpush1.msra.mxu0 0.0
  %995 = vmatprep.subr.mxu0 0.0
  %996 = vmatpush1.msra.mxu0 0.0
  %997 = vmatprep.subr.mxu0 0.0
  %998 = vmatpush1.msra.mxu0 0.0
  %999 = vmatprep.subr.mxu0 0.0
  %1000 = vmatpush1.msra.mxu0 0.0
  %1001 = vmatprep.subr.mxu0 0.0
  %1002 = vmatpush1.msra.mxu0 0.0
  %1003 = vmatprep.subr.mxu0 0.0
  %1004 = vmatpush1.msra.mxu0 0.0
  %1005 = vmatprep.subr.mxu0 0.0
  %1006 = vmatpush1.msra.mxu0 0.0
  %1007 = vmatprep.subr.mxu0 0.0
  %1008 = vmatpush1.msra.mxu0 0.0
  %1009 = vmatprep.subr.mxu0 0.0
  %1010 = vmatpush1.msra.mxu0 0.0
  %1011 = vmatprep.subr.mxu0 0.0
  %1012 = vmatpush1.msra.mxu0 0.0
  %1013 = vmatprep.subr.mxu0 0.0
  %1014 = vmatpush1.msra.mxu0 0.0
  %1015 = vmatprep.mubr.f32.mxu0 0.0
  %1016 = vmatmul.mubr.f32.gmra.mrb[0].mxu0 %v949
  %v1017 = vpop.f32.mrb[0].mxu0
  %v1018 = vadd.f32 %v946, %v1017
  %v1019 = vpop.f32.mrb[0].mxu0
  %v1020 = vadd.f32 %v946, %v1019
  %1021 = vdwg.mxu0
  %1022 = vmatprep.subr.mxu0 %v911
  %1023 = vmatpush1.msra.mxu0 %v910
  %1024 = vmatprep.subr.mxu0 %v915
  %1025 = vmatpush1.msra.mxu0 %v914
  %1026 = vmatprep.subr.mxu0 %v919
  %1027 = vmatpush1.msra.mxu0 %v918
  %1028 = vmatprep.subr.mxu0 %v923
  %1029 = vmatpush1.msra.mxu0 %v922
  %1030 = vmatprep.subr.mxu0 %v927
  %1031 = vmatpush1.msra.mxu0 %v926
  %1032 = vmatprep.subr.mxu0 %v931
  %1033 = vmatpush1.msra.mxu0 %v930
  %1034 = vmatprep.subr.mxu0 %v935
  %1035 = vmatpush1.msra.mxu0 %v934
  %1036 = vmatprep.subr.mxu0 %v939
  %1037 = vmatpush1.msra.mxu0 %v938
  %1038 = vmatprep.subr.mxu0 %v943
  %1039 = vmatpush1.msra.mxu0 %v942
  %1040 = vmatprep.subr.mxu0 0.0
  %1041 = vmatpush1.msra.mxu0 0.0
  %1042 = vmatprep.subr.mxu0 0.0
  %1043 = vmatpush1.msra.mxu0 0.0
  %1044 = vmatprep.subr.mxu0 0.0
  %1045 = vmatpush1.msra.mxu0 0.0
  %1046 = vmatprep.subr.mxu0 0.0
  %1047 = vmatpush1.msra.mxu0 0.0
  %1048 = vmatprep.subr.mxu0 0.0
  %1049 = vmatpush1.msra.mxu0 0.0
  %1050 = vmatprep.subr.mxu0 0.0
  %1051 = vmatpush1.msra.mxu0 0.0
  %1052 = vmatprep.subr.mxu0 0.0
  %1053 = vmatpush1.msra.mxu0 0.0
  %1054 = vmatprep.subr.mxu0 0.0
  %1055 = vmatpush1.msra.mxu0 0.0
  %1056 = vmatprep.subr.mxu0 0.0
  %1057 = vmatpush1.msra.mxu0 0.0
  %1058 = vmatprep.subr.mxu0 0.0
  %1059 = vmatpush1.msra.mxu0 0.0
  %1060 = vmatprep.subr.mxu0 0.0
  %1061 = vmatpush1.msra.mxu0 0.0
  %1062 = vmatprep.subr.mxu0 0.0
  %1063 = vmatpush1.msra.mxu0 0.0
  %1064 = vmatprep.subr.mxu0 0.0
  %1065 = vmatpush1.msra.mxu0 0.0
  %1066 = vmatprep.subr.mxu0 0.0
  %1067 = vmatpush1.msra.mxu0 0.0
  %1068 = vmatprep.subr.mxu0 0.0
  %1069 = vmatpush1.msra.mxu0 0.0
  %1070 = vmatprep.subr.mxu0 0.0
  %1071 = vmatpush1.msra.mxu0 0.0
  %1072 = vmatprep.subr.mxu0 0.0
  %1073 = vmatpush1.msra.mxu0 0.0
  %1074 = vmatprep.subr.mxu0 0.0
  %1075 = vmatpush1.msra.mxu0 0.0
  %1076 = vmatprep.subr.mxu0 0.0
  %1077 = vmatpush1.msra.mxu0 0.0
  %1078 = vmatprep.subr.mxu0 0.0
  %1079 = vmatpush1.msra.mxu0 0.0
  %1080 = vmatprep.subr.mxu0 0.0
  %1081 = vmatpush1.msra.mxu0 0.0
  %1082 = vmatprep.subr.mxu0 0.0
  %1083 = vmatpush1.msra.mxu0 0.0
  %1084 = vmatprep.subr.mxu0 0.0
  %1085 = vmatpush1.msra.mxu0 0.0
  %1086 = vmatprep.mubr.f32.mxu0 0.0
  %1087 = vmatmul.mubr.f32.gmra.mrb[0].mxu0 %v949
  %v1088 = vpop.f32.mrb[0].mxu0
  %v1089 = vadd.f32 %v946, %v1088
  %v1090 = vpop.f32.mrb[0].mxu0
  %v1091 = vadd.f32 %v946, %v1090
  %1092 = vdwg.mxu0
  %v1093 = vadd.f32 %v1018, %v1020
  %1094 = vadd.xlane.f32.xlu0 %v1093
  %v1095 = vpop.xlane.xlu0 %1094
  %v1096 = vrot.slane %v1095, 4
  %v1097 = vadd.f32 %v1095, %v1096
  %v1098 = vrot.slane %v1097, 2
  %v1099 = vadd.f32 %v1097, %v1098
  %v1100 = vrot.slane %v1099, 1
  %v1101 = vadd.f32 %v1099, %v1100
  %v1102 = vadd.f32 %v1089, %v1091
  %1103 = vadd.xlane.f32.xlu0 %v1102
  %v1104 = vpop.xlane.xlu0 %1103
  %v1105 = vrot.slane %v1104, 4
  %v1106 = vadd.f32 %v1104, %v1105
  %v1107 = vrot.slane %v1106, 2
  %v1108 = vadd.f32 %v1106, %v1107
  %v1109 = vrot.slane %v1108, 1
  %v1110 = vadd.f32 %v1108, %v1109
  %v1111 = vsel %vm39, %v1101, %v1110
  %v1112 = vsel %vm40, %v1101, %v1110
  %v1113 = vsel %vm41, %v1101, %v1110
  %v1114 = vsel %vm42, %v1101, %v1110
  %v1115 = vmul.f32 %v1111, 0.00048828125
  %v1116 = vmul.f32 %v1112, 0.00048828125
  %v1117 = vmul.f32 %v1113, 0.00048828125
  %v1118 = vmul.f32 %v1114, 0.00048828125
  %v1119 = vsub.f32 %v1018, %v1115
  %v1120 = vsub.f32 %v1020, %v1116
  %v1121 = vsub.f32 %v1089, %v1117
  %v1122 = vsub.f32 %v1091, %v1118
  %v1123 = vmul.f32 %v1119, %v1119
  %v1124 = vmul.f32 %v1120, %v1120
  %v1125 = vmul.f32 %v1121, %v1121
  %v1126 = vmul.f32 %v1122, %v1122
  %v1127 = vadd.f32 %v1123, %v1124
  %1128 = vadd.xlane.f32.xlu0 %v1127
  %v1129 = vpop.xlane.xlu0 %1128
  %v1130 = vrot.slane %v1129, 4
  %v1131 = vadd.f32 %v1129, %v1130
  %v1132 = vrot.slane %v1131, 2
  %v1133 = vadd.f32 %v1131, %v1132
  %v1134 = vrot.slane %v1133, 1
  %v1135 = vadd.f32 %v1133, %v1134
  %v1136 = vadd.f32 %v1125, %v1126
  %1137 = vadd.xlane.f32.xlu0 %v1136
  %v1138 = vpop.xlane.xlu0 %1137
  %v1139 = vrot.slane %v1138, 4
  %v1140 = vadd.f32 %v1138, %v1139
  %v1141 = vrot.slane %v1140, 2
  %v1142 = vadd.f32 %v1140, %v1141
  %v1143 = vrot.slane %v1142, 1
  %v1144 = vadd.f32 %v1142, %v1143
  %v1145 = vsel %vm39, %v1135, %v1144
  %v1146 = vsel %vm40, %v1135, %v1144
  %v1147 = vsel %vm41, %v1135, %v1144
  %v1148 = vsel %vm42, %v1135, %v1144
  %v1149 = vmul.f32 %v1145, 0.00048828125
  %v1150 = vmul.f32 %v1146, 0.00048828125
  %v1151 = vmul.f32 %v1147, 0.00048828125
  %v1152 = vmul.f32 %v1148, 0.00048828125
  %v1153 = vadd.f32 %v1149, 1e-05
  %v1154 = vadd.f32 %v1150, 1e-05
  %v1155 = vadd.f32 %v1151, 1e-05
  %v1156 = vadd.f32 %v1152, 1e-05
  %v1157 = vrsqrt.pop %v1153
  %v1158 = vrsqrt.pop %v1154
  %v1159 = vrsqrt.pop %v1155
  %v1160 = vrsqrt.pop %v1156
  %1161 = vset.pattern.permute.xlu0 12
  %1162 = vperm.xlu0 %1161, %v23
  %v1163 = vpop.permute.xlu0 %1162
  %v1165 = vmul.f32 %v1157, %v1163
  %v1166 = vmul.f32 %v1158, %v1163
  %v1167 = vmul.f32 %v1159, %v1163
  %v1168 = vmul.f32 %v1160, %v1163
  %v1169 = vmul.f32 %v1119, %v1165
  %v1170 = vmul.f32 %v1120, %v1166
  %v1171 = vmul.f32 %v1121, %v1167
  %v1172 = vmul.f32 %v1122, %v1168
  %1173 = vset.pattern.permute.xlu0 13
  %1174 = vperm.xlu0 %1173, %v23
  %v1175 = vpop.permute.xlu0 %1174
  %v1177 = vadd.f32 %v1169, %v1175
  %v1178 = vadd.f32 %v1170, %v1175
  %v1179 = vadd.f32 %v1171, %v1175
  %v1180 = vadd.f32 %v1172, %v1175
  %vm1181 = vcmask 31744
  %v1182 = vsel %vm1181, %v23, 0
  %v1185 = vsel %vm1181, %v24, 0
  %v1188 = vsel %vm1181, %v25, 0
  %vm1190 = vcmask 1043456
  %v1191 = vsel %vm1190, %v14, 0
  %v1193 = vsel %vm1190, %v18, 0
  %v1195 = vsel %vm1190, %v16, 0
  %v1197 = vsel %vm1190, %v21, 0
  %1199 = vmatprep.subr.mxu0 %v1193
  %1200 = vmatpush1.msra.mxu0 %v1191
  %1201 = vmatprep.subr.mxu0 0.0
  %1202 = vmatpush1.msra.mxu0 0.0
  %1203 = vmatprep.subr.mxu0 0.0
  %1204 = vmatpush1.msra.mxu0 0.0
  %1205 = vmatprep.subr.mxu0 0.0
  %1206 = vmatpush1.msra.mxu0 0.0
  %1207 = vmatprep.subr.mxu0 0.0
  %1208 = vmatpush1.msra.mxu0 0.0
  %1209 = vmatprep.subr.mxu0 0.0
  %1210 = vmatpush1.msra.mxu0 0.0
  %1211 = vmatprep.subr.mxu0 0.0
  %1212 = vmatpush1.msra.mxu0 0.0
  %1213 = vmatprep.subr.mxu0 0.0
  %1214 = vmatpush1.msra.mxu0 0.0
  %1215 = vmatprep.subr.mxu0 0.0
  %1216 = vmatpush1.msra.mxu0 0.0
  %1217 = vmatprep.subr.mxu0 0.0
  %1218 = vmatpush1.msra.mxu0 0.0
  %1219 = vmatprep.subr.mxu0 0.0
  %1220 = vmatpush1.msra.mxu0 0.0
  %1221 = vmatprep.subr.mxu0 0.0
  %1222 = vmatpush1.msra.mxu0 0.0
  %1223 = vmatprep.subr.mxu0 0.0
  %1224 = vmatpush1.msra.mxu0 0.0
  %1225 = vmatprep.subr.mxu0 0.0
  %1226 = vmatpush1.msra.mxu0 0.0
  %1227 = vmatprep.subr.mxu0 0.0
  %1228 = vmatpush1.msra.mxu0 0.0
  %1229 = vmatprep.subr.mxu0 0.0
  %1230 = vmatpush1.msra.mxu0 0.0
  %1231 = vmatprep.subr.mxu0 0.0
  %1232 = vmatpush1.msra.mxu0 0.0
  %1233 = vmatprep.subr.mxu0 0.0
  %1234 = vmatpush1.msra.mxu0 0.0
  %1235 = vmatprep.subr.mxu0 0.0
  %1236 = vmatpush1.msra.mxu0 0.0
  %1237 = vmatprep.subr.mxu0 0.0
  %1238 = vmatpush1.msra.mxu0 0.0
  %1239 = vmatprep.subr.mxu0 0.0
  %1240 = vmatpush1.msra.mxu0 0.0
  %1241 = vmatprep.subr.mxu0 0.0
  %1242 = vmatpush1.msra.mxu0 0.0
  %1243 = vmatprep.subr.mxu0 0.0
  %1244 = vmatpush1.msra.mxu0 0.0
  %1245 = vmatprep.subr.mxu0 0.0
  %1246 = vmatpush1.msra.mxu0 0.0
  %1247 = vmatprep.subr.mxu0 0.0
  %1248 = vmatpush1.msra.mxu0 0.0
  %1249 = vmatprep.subr.mxu0 0.0
  %1250 = vmatpush1.msra.mxu0 0.0
  %1251 = vmatprep.subr.mxu0 0.0
  %1252 = vmatpush1.msra.mxu0 0.0
  %1253 = vmatprep.subr.mxu0 0.0
  %1254 = vmatpush1.msra.mxu0 0.0
  %1255 = vmatprep.subr.mxu0 0.0
  %1256 = vmatpush1.msra.mxu0 0.0
  %1257 = vmatprep.subr.mxu0 0.0
  %1258 = vmatpush1.msra.mxu0 0.0
  %1259 = vmatprep.subr.mxu0 0.0
  %1260 = vmatpush1.msra.mxu0 0.0
  %1261 = vmatprep.subr.mxu0 0.0
  %1262 = vmatpush1.msra.mxu0 0.0
  %1263 = vmatprep.mubr.f32.mxu0 0.0
  %1264 = vmatmul.mubr.f32.gmra.mrb[0].mxu0 %v1182
  %v1265 = vpop.f32.mrb[0].mxu0
  %v1266 = vadd.f32 0.0, %v1265
  %v1267 = vpop.f32.mrb[0].mxu0
  %v1268 = vadd.f32 0.0, %v1267
  %1269 = vmatprep.mubr.f32.mxu0 0.0
  %1270 = vmatmul.mubr.f32.gmra.mrb[0].mxu0 %v1185
  %v1271 = vpop.f32.mrb[0].mxu0
  %v1272 = vadd.f32 0.0, %v1271
  %v1273 = vpop.f32.mrb[0].mxu0
  %v1274 = vadd.f32 0.0, %v1273
  %1275 = vmatprep.mubr.f32.mxu0 0.0
  %1276 = vmatmul.mubr.f32.gmra.mrb[0].mxu0 %v1188
  %v1277 = vpop.f32.mrb[0].mxu0
  %v1278 = vadd.f32 0.0, %v1277
  %v1279 = vpop.f32.mrb[0].mxu0
  %v1280 = vadd.f32 0.0, %v1279
  %1281 = vdwg.mxu0
  %1282 = vmatprep.subr.mxu0 %v1197
  %1283 = vmatpush1.msra.mxu0 %v1195
  %1284 = vmatprep.subr.mxu0 0.0
  %1285 = vmatpush1.msra.mxu0 0.0
  %1286 = vmatprep.subr.mxu0 0.0
  %1287 = vmatpush1.msra.mxu0 0.0
  %1288 = vmatprep.subr.mxu0 0.0
  %1289 = vmatpush1.msra.mxu0 0.0
  %1290 = vmatprep.subr.mxu0 0.0
  %1291 = vmatpush1.msra.mxu0 0.0
  %1292 = vmatprep.subr.mxu0 0.0
  %1293 = vmatpush1.msra.mxu0 0.0
  %1294 = vmatprep.subr.mxu0 0.0
  %1295 = vmatpush1.msra.mxu0 0.0
  %1296 = vmatprep.subr.mxu0 0.0
  %1297 = vmatpush1.msra.mxu0 0.0
  %1298 = vmatprep.subr.mxu0 0.0
  %1299 = vmatpush1.msra.mxu0 0.0
  %1300 = vmatprep.subr.mxu0 0.0
  %1301 = vmatpush1.msra.mxu0 0.0
  %1302 = vmatprep.subr.mxu0 0.0
  %1303 = vmatpush1.msra.mxu0 0.0
  %1304 = vmatprep.subr.mxu0 0.0
  %1305 = vmatpush1.msra.mxu0 0.0
  %1306 = vmatprep.subr.mxu0 0.0
  %1307 = vmatpush1.msra.mxu0 0.0
  %1308 = vmatprep.subr.mxu0 0.0
  %1309 = vmatpush1.msra.mxu0 0.0
  %1310 = vmatprep.subr.mxu0 0.0
  %1311 = vmatpush1.msra.mxu0 0.0
  %1312 = vmatprep.subr.mxu0 0.0
  %1313 = vmatpush1.msra.mxu0 0.0
  %1314 = vmatprep.subr.mxu0 0.0
  %1315 = vmatpush1.msra.mxu0 0.0
  %1316 = vmatprep.subr.mxu0 0.0
  %1317 = vmatpush1.msra.mxu0 0.0
  %1318 = vmatprep.subr.mxu0 0.0
  %1319 = vmatpush1.msra.mxu0 0.0
  %1320 = vmatprep.subr.mxu0 0.0
  %1321 = vmatpush1.msra.mxu0 0.0
  %1322 = vmatprep.subr.mxu0 0.0
  %1323 = vmatpush1.msra.mxu0 0.0
  %1324 = vmatprep.subr.mxu0 0.0
  %1325 = vmatpush1.msra.mxu0 0.0
  %1326 = vmatprep.subr.mxu0 0.0
  %1327 = vmatpush1.msra.mxu0 0.0
  %1328 = vmatprep.subr.mxu0 0.0
  %1329 = vmatpush1.msra.mxu0 0.0
  %1330 = vmatprep.subr.mxu0 0.0
  %1331 = vmatpush1.msra.mxu0 0.0
  %1332 = vmatprep.subr.mxu0 0.0
  %1333 = vmatpush1.msra.mxu0 0.0
  %1334 = vmatprep.subr.mxu0 0.0
  %1335 = vmatpush1.msra.mxu0 0.0
  %1336 = vmatprep.subr.mxu0 0.0
  %1337 = vmatpush1.msra.mxu0 0.0
  %1338 = vmatprep.subr.mxu0 0.0
  %1339 = vmatpush1.msra.mxu0 0.0
  %1340 = vmatprep.subr.mxu0 0.0
  %1341 = vmatpush1.msra.mxu0 0.0
  %1342 = vmatprep.subr.mxu0 0.0
  %1343 = vmatpush1.msra.mxu0 0.0
  %1344 = vmatprep.subr.mxu0 0.0
  %1345 = vmatpush1.msra.mxu0 0.0
  %1346 = vmatprep.mubr.f32.mxu0 0.0
  %1347 = vmatmul.mubr.f32.gmra.mrb[0].mxu0 %v1182
  %v1348 = vpop.f32.mrb[0].mxu0
  %v1349 = vadd.f32 0.0, %v1348
  %v1350 = vpop.f32.mrb[0].mxu0
  %v1351 = vadd.f32 0.0, %v1350
  %1352 = vmatprep.mubr.f32.mxu0 0.0
  %1353 = vmatmul.mubr.f32.gmra.mrb[0].mxu0 %v1185
  %v1354 = vpop.f32.mrb[0].mxu0
  %v1355 = vadd.f32 0.0, %v1354
  %v1356 = vpop.f32.mrb[0].mxu0
  %v1357 = vadd.f32 0.0, %v1356
  %1358 = vmatprep.mubr.f32.mxu0 0.0
  %1359 = vmatmul.mubr.f32.gmra.mrb[0].mxu0 %v1188
  %v1360 = vpop.f32.mrb[0].mxu0
  %v1361 = vadd.f32 0.0, %v1360
  %v1362 = vpop.f32.mrb[0].mxu0
  %v1363 = vadd.f32 0.0, %v1362
  %1364 = vdwg.mxu0
  %v1365 = vadd.f32 %v1177, %v1266
  %v1366 = vadd.f32 %v1178, %v1268
  %v1367 = vadd.f32 %v1179, %v1349
  %v1368 = vadd.f32 %v1180, %v1351
  %1369 = vset.pattern.permute.xlu0 14
  %1370 = vperm.xlu0 %1369, %v23
  %v1371 = vpop.permute.xlu0 %1370
  %v1373 = vadd.f32 %v1365, %v1371
  %v1374 = vadd.f32 %v1366, %v1371
  %v1375 = vadd.f32 %v1367, %v1371
  %v1376 = vadd.f32 %v1368, %v1371
  %1377 = vset.pattern.permute.xlu0 18
  %1378 = vperm.xlu0 %1377, %v23
  %v1379 = vpop.permute.xlu0 %1378
  %1381 = vset.pattern.permute.xlu0 18
  %1382 = vperm.xlu0 %1381, %v24
  %v1383 = vpop.permute.xlu0 %1382
  %v1385 = vadd.f32 %v1272, %v1379
  %v1386 = vadd.f32 %v1274, %v1379
  %v1387 = vadd.f32 %v1355, %v1379
  %v1388 = vadd.f32 %v1357, %v1379
  %v1389 = vadd.f32 %v1278, %v1383
  %v1390 = vadd.f32 %v1280, %v1383
  %v1391 = vadd.f32 %v1361, %v1383
  %v1392 = vadd.f32 %v1363, %v1383
  %vm1393 = vcmask 1047556
  %v1394 = vsel %vm1393, %v1385, -inf
  %v1395 = vsel %vm1393, %v1386, -inf
  %v1396 = vmax.f32 %v1394, %v1395
  %1397 = vmax.xlane.f32.xlu0 %v1396
  %v1398 = vpop.xlane.xlu0 %1397
  %v1399 = vsel %vm1393, %v1387, -inf
  %v1400 = vsel %vm1393, %v1388, -inf
  %v1401 = vmax.f32 %v1399, %v1400
  %1402 = vmax.xlane.f32.xlu0 %v1401
  %v1403 = vpop.xlane.xlu0 %1402
  %v1404 = vsel %vm39, 1, 0
  %v1405 = vsel %vm40, 1, 0
  %v1406 = vsel %vm41, 1, 0
  %v1407 = vsel %vm42, 1, 0
  %vm1408 = vcmp.eq.s32.totalorder %v1404, 1
  %vm1409 = vcmp.eq.s32.totalorder %v1405, 1
  %vm1410 = vcmp.eq.s32.totalorder %v1406, 1
  %vm1411 = vcmp.eq.s32.totalorder %v1407, 1
  %v1412 = vsel %vm1408, %v1398, %v1403
  %v1413 = vsel %vm1409, %v1398, %v1403
  %v1414 = vsel %vm1410, %v1398, %v1403
  %v1415 = vsel %vm1411, %v1398, %v1403
  %v1416 = vsub.f32 %v1385, %v1412
  %v1417 = vsub.f32 %v1386, %v1413
  %v1418 = vsub.f32 %v1387, %v1414
  %v1419 = vsub.f32 %v1388, %v1415
  %v1420 = vmul.f32 %v1416, 1.442695
  %v1421 = vpow.pop %v1420
  %v1422 = vmul.f32 %v1417, 1.442695
  %v1423 = vpow.pop %v1422
  %v1424 = vmul.f32 %v1418, 1.442695
  %v1425 = vpow.pop %v1424
  %v1426 = vmul.f32 %v1419, 1.442695
  %v1427 = vpow.pop %v1426
  %v1428 = vsel %vm1393, %v1421, 0.0
  %v1429 = vsel %vm1393, %v1423, 0.0
  %v1430 = vadd.f32 %v1428, %v1429
  %1431 = vadd.xlane.f32.xlu0 %v1430
  %v1432 = vpop.xlane.xlu0 %1431
  %v1433 = vsel %vm1393, %v1425, 0.0
  %v1434 = vsel %vm1393, %v1427, 0.0
  %v1435 = vadd.f32 %v1433, %v1434
  %1436 = vadd.xlane.f32.xlu0 %v1435
  %v1437 = vpop.xlane.xlu0 %1436
  %v1438 = vsel %vm1408, %v1432, %v1437
  %v1439 = vsel %vm1409, %v1432, %v1437
  %v1440 = vsel %vm1410, %v1432, %v1437
  %v1441 = vsel %vm1411, %v1432, %v1437
  %v1442 = vrcp.pop %v1438
  %v1443 = vrcp.pop %v1439
  %v1444 = vrcp.pop %v1440
  %v1445 = vrcp.pop %v1441
  %v1446 = vmul.f32 %v1421, %v1442
  %v1447 = vmul.f32 %v1423, %v1443
  %v1448 = vmul.f32 %v1425, %v1444
  %v1449 = vmul.f32 %v1427, %v1445
  %v1452 = vrot.slane %v1446, 4
  %v1453 = vrot.slane %v1447, 4
  %1456 = vmatprep.subr.mxu0 %v1453
  %1457 = vmatpush1.xpose.msra.mxu0 %v1452
  %1458 = vmatprep.subr.mxu0 0.0
  %1459 = vmatpush1.xpose.msra.mxu0 0.0
  %1460 = vmatprep.subr.mxu0 0.0
  %1461 = vmatpush1.xpose.msra.mxu0 0.0
  %1462 = vmatprep.subr.mxu0 0.0
  %1463 = vmatpush1.xpose.msra.mxu0 0.0
  %1464 = vmatprep.subr.mxu0 0.0
  %1465 = vmatpush1.xpose.msra.mxu0 0.0
  %1466 = vmatprep.subr.mxu0 0.0
  %1467 = vmatpush1.xpose.msra.mxu0 0.0
  %1468 = vmatprep.subr.mxu0 0.0
  %1469 = vmatpush1.xpose.msra.mxu0 0.0
  %1470 = vmatprep.subr.mxu0 0.0
  %1471 = vmatpush1.xpose.msra.mxu0 0.0
  %1472 = vmatprep.subr.mxu0 0.0
  %1473 = vmatpush1.xpose.msra.mxu0 0.0
  %1474 = vmatprep.subr.mxu0 0.0
  %1475 = vmatpush1.xpose.msra.mxu0 0.0
  %1476 = vmatprep.subr.mxu0 0.0
  %1477 = vmatpush1.xpose.msra.mxu0 0.0
  %1478 = vmatprep.subr.mxu0 0.0
  %1479 = vmatpush1.xpose.msra.mxu0 0.0
  %1480 = vmatprep.subr.mxu0 0.0
  %1481 = vmatpush1.xpose.msra.mxu0 0.0
  %1482 = vmatprep.subr.mxu0 0.0
  %1483 = vmatpush1.xpose.msra.mxu0 0.0
  %1484 = vmatprep.subr.mxu0 0.0
  %1485 = vmatpush1.xpose.msra.mxu0 0.0
  %1486 = vmatprep.subr.mxu0 0.0
  %1487 = vmatpush1.xpose.msra.mxu0 0.0
  %1488 = vmatprep.subr.mxu0 0.0
  %1489 = vmatpush1.xpose.msra.mxu0 0.0
  %1490 = vmatprep.subr.mxu0 0.0
  %1491 = vmatpush1.xpose.msra.mxu0 0.0
  %1492 = vmatprep.subr.mxu0 0.0
  %1493 = vmatpush1.xpose.msra.mxu0 0.0
  %1494 = vmatprep.subr.mxu0 0.0
  %1495 = vmatpush1.xpose.msra.mxu0 0.0
  %1496 = vmatprep.subr.mxu0 0.0
  %1497 = vmatpush1.xpose.msra.mxu0 0.0
  %1498 = vmatprep.subr.mxu0 0.0
  %1499 = vmatpush1.xpose.msra.mxu0 0.0
  %1500 = vmatprep.subr.mxu0 0.0
  %1501 = vmatpush1.xpose.msra.mxu0 0.0
  %1502 = vmatprep.subr.mxu0 0.0
  %1503 = vmatpush1.xpose.msra.mxu0 0.0
  %1504 = vmatprep.subr.mxu0 0.0
  %1505 = vmatpush1.xpose.msra.mxu0 0.0
  %1506 = vmatprep.subr.mxu0 0.0
  %1507 = vmatpush1.xpose.msra.mxu0 0.0
  %1508 = vmatprep.subr.mxu0 0.0
  %1509 = vmatpush1.xpose.msra.mxu0 0.0
  %1510 = vmatprep.subr.mxu0 0.0
  %1511 = vmatpush1.xpose.msra.mxu0 0.0
  %1512 = vmatprep.subr.mxu0 0.0
  %1513 = vmatpush1.xpose.msra.mxu0 0.0
  %1514 = vmatprep.subr.mxu0 0.0
  %1515 = vmatpush1.xpose.msra.mxu0 0.0
  %1516 = vmatprep.subr.mxu0 0.0
  %1517 = vmatpush1.xpose.msra.mxu0 0.0
  %1518 = vmatprep.subr.mxu0 0.0
  %1519 = vmatpush1.xpose.msra.mxu0 0.0
  %1520 = vmatprep.mubr.f32.mxu0 %v1390
  %1521 = vmatmul.mubr.f32.gmra.mrb[0].mxu0 %v1389
  %v1522 = vpop.f32.mrb[0].mxu0
  %v1523 = vadd.f32 0.0, %v1522
  %v1524 = vpop.f32.mrb[0].mxu0
  %1525 = vdwg.mxu0
  %v1527 = vsel %vm1181, %v1523, 0
  %v1530 = vsel %vm1190, %v1385, 0
  %v1533 = vsel %vm1190, %v1386, 0
  %1535 = vmatprep.subr.mxu0 %v1533
  %1536 = vmatpush1.msra.mxu0 %v1530
  %1537 = vmatprep.subr.mxu0 0.0
  %1538 = vmatpush1.msra.mxu0 0.0
  %1539 = vmatprep.subr.mxu0 0.0
  %1540 = vmatpush1.msra.mxu0 0.0
  %1541 = vmatprep.subr.mxu0 0.0
  %1542 = vmatpush1.msra.mxu0 0.0
  %1543 = vmatprep.subr.mxu0 0.0
  %1544 = vmatpush1.msra.mxu0 0.0
  %1545 = vmatprep.subr.mxu0 0.0
  %1546 = vmatpush1.msra.mxu0 0.0
  %1547 = vmatprep.subr.mxu0 0.0
  %1548 = vmatpush1.msra.mxu0 0.0
  %1549 = vmatprep.subr.mxu0 0.0
  %1550 = vmatpush1.msra.mxu0 0.0
  %1551 = vmatprep.subr.mxu0 0.0
  %1552 = vmatpush1.msra.mxu0 0.0
  %1553 = vmatprep.subr.mxu0 0.0
  %1554 = vmatpush1.msra.mxu0 0.0
  %1555 = vmatprep.subr.mxu0 0.0
  %1556 = vmatpush1.msra.mxu0 0.0
  %1557 = vmatprep.subr.mxu0 0.0
  %1558 = vmatpush1.msra.mxu0 0.0
  %1559 = vmatprep.subr.mxu0 0.0
  %1560 = vmatpush1.msra.mxu0 0.0
  %1561 = vmatprep.subr.mxu0 0.0
  %1562 = vmatpush1.msra.mxu0 0.0
  %1563 = vmatprep.subr.mxu0 0.0
  %1564 = vmatpush1.msra.mxu0 0.0
  %1565 = vmatprep.subr.mxu0 0.0
  %1566 = vmatpush1.msra.mxu0 0.0
  %1567 = vmatprep.subr.mxu0 0.0
  %1568 = vmatpush1.msra.mxu0 0.0
  %1569 = vmatprep.subr.mxu0 0.0
  %1570 = vmatpush1.msra.mxu0 0.0
  %1571 = vmatprep.subr.mxu0 0.0
  %1572 = vmatpush1.msra.mxu0 0.0
  %1573 = vmatprep.subr.mxu0 0.0
  %1574 = vmatpush1.msra.mxu0 0.0
  %1575 = vmatprep.subr.mxu0 0.0
  %1576 = vmatpush1.msra.mxu0 0.0
  %1577 = vmatprep.subr.mxu0 0.0
  %1578 = vmatpush1.msra.mxu0 0.0
  %1579 = vmatprep.subr.mxu0 0.0
  %1580 = vmatpush1.msra.mxu0 0.0
  %1581 = vmatprep.subr.mxu0 0.0
  %1582 = vmatpush1.msra.mxu0 0.0
  %1583 = vmatprep.subr.mxu0 0.0
  %1584 = vmatpush1.msra.mxu0 0.0
  %1585 = vmatprep.subr.mxu0 0.0
  %1586 = vmatpush1.msra.mxu0 0.0
  %1587 = vmatprep.subr.mxu0 0.0
  %1588 = vmatpush1.msra.mxu0 0.0
  %1589 = vmatprep.subr.mxu0 0.0
  %1590 = vmatpush1.msra.mxu0 0.0
  %1591 = vmatprep.subr.mxu0 0.0
  %1592 = vmatpush1.msra.mxu0 0.0
  %1593 = vmatprep.subr.mxu0 0.0
  %1594 = vmatpush1.msra.mxu0 0.0
  %1595 = vmatprep.subr.mxu0 0.0
  %1596 = vmatpush1.msra.mxu0 0.0
  %1597 = vmatprep.subr.mxu0 0.0
  %1598 = vmatpush1.msra.mxu0 0.0
  %1599 = vmatprep.mubr.f32.mxu0 0.0
  %1600 = vmatmul.mubr.f32.gmra.mrb[0].mxu0 %v1527
  %v1601 = vpop.f32.mrb[0].mxu0
  %v1602 = vadd.f32 0.0, %v1601
  %v1603 = vpop.f32.mrb[0].mxu0
  %v1604 = vadd.f32 0.0, %v1603
  %1605 = vdwg.mxu0
  %v1608 = vrot.slane %v1448, 4
  %v1609 = vrot.slane %v1449, 4
  %1612 = vmatprep.subr.mxu0 %v1609
  %1613 = vmatpush1.xpose.msra.mxu0 %v1608
  %1614 = vmatprep.subr.mxu0 0.0
  %1615 = vmatpush1.xpose.msra.mxu0 0.0
  %1616 = vmatprep.subr.mxu0 0.0
  %1617 = vmatpush1.xpose.msra.mxu0 0.0
  %1618 = vmatprep.subr.mxu0 0.0
  %1619 = vmatpush1.xpose.msra.mxu0 0.0
  %1620 = vmatprep.subr.mxu0 0.0
  %1621 = vmatpush1.xpose.msra.mxu0 0.0
  %1622 = vmatprep.subr.mxu0 0.0
  %1623 = vmatpush1.xpose.msra.mxu0 0.0
  %1624 = vmatprep.subr.mxu0 0.0
  %1625 = vmatpush1.xpose.msra.mxu0 0.0
  %1626 = vmatprep.subr.mxu0 0.0
  %1627 = vmatpush1.xpose.msra.mxu0 0.0
  %1628 = vmatprep.subr.mxu0 0.0
  %1629 = vmatpush1.xpose.msra.mxu0 0.0
  %1630 = vmatprep.subr.mxu0 0.0
  %1631 = vmatpush1.xpose.msra.mxu0 0.0
  %1632 = vmatprep.subr.mxu0 0.0
  %1633 = vmatpush1.xpose.msra.mxu0 0.0
  %1634 = vmatprep.subr.mxu0 0.0
  %1635 = vmatpush1.xpose.msra.mxu0 0.0
  %1636 = vmatprep.subr.mxu0 0.0
  %1637 = vmatpush1.xpose.msra.mxu0 0.0
  %1638 = vmatprep.subr.mxu0 0.0
  %1639 = vmatpush1.xpose.msra.mxu0 0.0
  %1640 = vmatprep.subr.mxu0 0.0
  %1641 = vmatpush1.xpose.msra.mxu0 0.0
  %1642 = vmatprep.subr.mxu0 0.0
  %1643 = vmatpush1.xpose.msra.mxu0 0.0
  %1644 = vmatprep.subr.mxu0 0.0
  %1645 = vmatpush1.xpose.msra.mxu0 0.0
  %1646 = vmatprep.subr.mxu0 0.0
  %1647 = vmatpush1.xpose.msra.mxu0 0.0
  %1648 = vmatprep.subr.mxu0 0.0
  %1649 = vmatpush1.xpose.msra.mxu0 0.0
  %1650 = vmatprep.subr.mxu0 0.0
  %1651 = vmatpush1.xpose.msra.mxu0 0.0
  %1652 = vmatprep.subr.mxu0 0.0
  %1653 = vmatpush1.xpose.msra.mxu0 0.0
  %1654 = vmatprep.subr.mxu0 0.0
  %1655 = vmatpush1.xpose.msra.mxu0 0.0
  %1656 = vmatprep.subr.mxu0 0.0
  %1657 = vmatpush1.xpose.msra.mxu0 0.0
  %1658 = vmatprep.subr.mxu0 0.0
  %1659 = vmatpush1.xpose.msra.mxu0 0.0
  %1660 = vmatprep.subr.mxu0 0.0
  %1661 = vmatpush1.xpose.msra.mxu0 0.0
  %1662 = vmatprep.subr.mxu0 0.0
  %1663 = vmatpush1.xpose.msra.mxu0 0.0
  %1664 = vmatprep.subr.mxu0 0.0
  %1665 = vmatpush1.xpose.msra.mxu0 0.0
  %1666 = vmatprep.subr.mxu0 0.0
  %1667 = vmatpush1.xpose.msra.mxu0 0.0
  %1668 = vmatprep.subr.mxu0 0.0
  %1669 = vmatpush1.xpose.msra.mxu0 0.0
  %1670 = vmatprep.subr.mxu0 0.0
  %1671 = vmatpush1.xpose.msra.mxu0 0.0
  %1672 = vmatprep.subr.mxu0 0.0
  %1673 = vmatpush1.xpose.msra.mxu0 0.0
  %1674 = vmatprep.subr.mxu0 0.0
  %1675 = vmatpush1.xpose.msra.mxu0 0.0
  %1676 = vmatprep.mubr.f32.mxu0 %v1392
  %1677 = vmatmul.mubr.f32.gmra.mrb[0].mxu0 %v1391
  %v1678 = vpop.f32.mrb[0].mxu0
  %v1679 = vadd.f32 0.0, %v1678
  %v1680 = vpop.f32.mrb[0].mxu0
  %1681 = vdwg.mxu0
  %v1683 = vsel %vm1181, %v1679, 0
  %v1686 = vsel %vm1190, %v1387, 0
  %v1689 = vsel %vm1190, %v1388, 0
  %1691 = vmatprep.subr.mxu0 %v1689
  %1692 = vmatpush1.msra.mxu0 %v1686
  %1693 = vmatprep.subr.mxu0 0.0
  %1694 = vmatpush1.msra.mxu0 0.0
  %1695 = vmatprep.subr.mxu0 0.0
  %1696 = vmatpush1.msra.mxu0 0.0
  %1697 = vmatprep.subr.mxu0 0.0
  %1698 = vmatpush1.msra.mxu0 0.0
  %1699 = vmatprep.subr.mxu0 0.0
  %1700 = vmatpush1.msra.mxu0 0.0
  %1701 = vmatprep.subr.mxu0 0.0
  %1702 = vmatpush1.msra.mxu0 0.0
  %1703 = vmatprep.subr.mxu0 0.0
  %1704 = vmatpush1.msra.mxu0 0.0
  %1705 = vmatprep.subr.mxu0 0.0
  %1706 = vmatpush1.msra.mxu0 0.0
  %1707 = vmatprep.subr.mxu0 0.0
  %1708 = vmatpush1.msra.mxu0 0.0
  %1709 = vmatprep.subr.mxu0 0.0
  %1710 = vmatpush1.msra.mxu0 0.0
  %1711 = vmatprep.subr.mxu0 0.0
  %1712 = vmatpush1.msra.mxu0 0.0
  %1713 = vmatprep.subr.mxu0 0.0
  %1714 = vmatpush1.msra.mxu0 0.0
  %1715 = vmatprep.subr.mxu0 0.0
  %1716 = vmatpush1.msra.mxu0 0.0
  %1717 = vmatprep.subr.mxu0 0.0
  %1718 = vmatpush1.msra.mxu0 0.0
  %1719 = vmatprep.subr.mxu0 0.0
  %1720 = vmatpush1.msra.mxu0 0.0
  %1721 = vmatprep.subr.mxu0 0.0
  %1722 = vmatpush1.msra.mxu0 0.0
  %1723 = vmatprep.subr.mxu0 0.0
  %1724 = vmatpush1.msra.mxu0 0.0
  %1725 = vmatprep.subr.mxu0 0.0
  %1726 = vmatpush1.msra.mxu0 0.0
  %1727 = vmatprep.subr.mxu0 0.0
  %1728 = vmatpush1.msra.mxu0 0.0
  %1729 = vmatprep.subr.mxu0 0.0
  %1730 = vmatpush1.msra.mxu0 0.0
  %1731 = vmatprep.subr.mxu0 0.0
  %1732 = vmatpush1.msra.mxu0 0.0
  %1733 = vmatprep.subr.mxu0 0.0
  %1734 = vmatpush1.msra.mxu0 0.0
  %1735 = vmatprep.subr.mxu0 0.0
  %1736 = vmatpush1.msra.mxu0 0.0
  %1737 = vmatprep.subr.mxu0 0.0
  %1738 = vmatpush1.msra.mxu0 0.0
  %1739 = vmatprep.subr.mxu0 0.0
  %1740 = vmatpush1.msra.mxu0 0.0
  %1741 = vmatprep.subr.mxu0 0.0
  %1742 = vmatpush1.msra.mxu0 0.0
  %1743 = vmatprep.subr.mxu0 0.0
  %1744 = vmatpush1.msra.mxu0 0.0
  %1745 = vmatprep.subr.mxu0 0.0
  %1746 = vmatpush1.msra.mxu0 0.0
  %1747 = vmatprep.subr.mxu0 0.0
  %1748 = vmatpush1.msra.mxu0 0.0
  %1749 = vmatprep.subr.mxu0 0.0
  %1750 = vmatpush1.msra.mxu0 0.0
  %1751 = vmatprep.subr.mxu0 0.0
  %1752 = vmatpush1.msra.mxu0 0.0
  %1753 = vmatprep.subr.mxu0 0.0
  %1754 = vmatpush1.msra.mxu0 0.0
  %1755 = vmatprep.mubr.f32.mxu0 0.0
  %1756 = vmatmul.mubr.f32.gmra.mrb[0].mxu0 %v1683
  %v1757 = vpop.f32.mrb[0].mxu0
  %v1758 = vadd.f32 0.0, %v1757
  %v1759 = vpop.f32.mrb[0].mxu0
  %v1760 = vadd.f32 0.0, %v1759
  %1761 = vdwg.mxu0
  %1762 = vset.pattern.permute.xlu0 15
  %1763 = vperm.xlu0 %1762, %v23
  %v1764 = vpop.permute.xlu0 %1763
  %1766 = vrot.lane.b32.xlu0 %v23, 124
  %v1767 = vpop.permute.xlu0 %1766
  %v1768 = vsel %vm1181, %v1767, 0
  %v1771 = vsel %vm1190, %v1602, 0
  %v1774 = vsel %vm1190, %v1604, 0
  %v1777 = vsel %vm1190, %v1758, 0
  %v1780 = vsel %vm1190, %v1760, 0
  %1782 = vmatprep.subr.mxu0 %v1774
  %1783 = vmatpush1.msra.mxu0 %v1771
  %1784 = vmatprep.subr.mxu0 0.0
  %1785 = vmatpush1.msra.mxu0 0.0
  %1786 = vmatprep.subr.mxu0 0.0
  %1787 = vmatpush1.msra.mxu0 0.0
  %1788 = vmatprep.subr.mxu0 0.0
  %1789 = vmatpush1.msra.mxu0 0.0
  %1790 = vmatprep.subr.mxu0 0.0
  %1791 = vmatpush1.msra.mxu0 0.0
  %1792 = vmatprep.subr.mxu0 0.0
  %1793 = vmatpush1.msra.mxu0 0.0
  %1794 = vmatprep.subr.mxu0 0.0
  %1795 = vmatpush1.msra.mxu0 0.0
  %1796 = vmatprep.subr.mxu0 0.0
  %1797 = vmatpush1.msra.mxu0 0.0
  %1798 = vmatprep.subr.mxu0 0.0
  %1799 = vmatpush1.msra.mxu0 0.0
  %1800 = vmatprep.subr.mxu0 0.0
  %1801 = vmatpush1.msra.mxu0 0.0
  %1802 = vmatprep.subr.mxu0 0.0
  %1803 = vmatpush1.msra.mxu0 0.0
  %1804 = vmatprep.subr.mxu0 0.0
  %1805 = vmatpush1.msra.mxu0 0.0
  %1806 = vmatprep.subr.mxu0 0.0
  %1807 = vmatpush1.msra.mxu0 0.0
  %1808 = vmatprep.subr.mxu0 0.0
  %1809 = vmatpush1.msra.mxu0 0.0
  %1810 = vmatprep.subr.mxu0 0.0
  %1811 = vmatpush1.msra.mxu0 0.0
  %1812 = vmatprep.subr.mxu0 0.0
  %1813 = vmatpush1.msra.mxu0 0.0
  %1814 = vmatprep.subr.mxu0 0.0
  %1815 = vmatpush1.msra.mxu0 0.0
  %1816 = vmatprep.subr.mxu0 0.0
  %1817 = vmatpush1.msra.mxu0 0.0
  %1818 = vmatprep.subr.mxu0 0.0
  %1819 = vmatpush1.msra.mxu0 0.0
  %1820 = vmatprep.subr.mxu0 0.0
  %1821 = vmatpush1.msra.mxu0 0.0
  %1822 = vmatprep.subr.mxu0 0.0
  %1823 = vmatpush1.msra.mxu0 0.0
  %1824 = vmatprep.subr.mxu0 0.0
  %1825 = vmatpush1.msra.mxu0 0.0
  %1826 = vmatprep.subr.mxu0 0.0
  %1827 = vmatpush1.msra.mxu0 0.0
  %1828 = vmatprep.subr.mxu0 0.0
  %1829 = vmatpush1.msra.mxu0 0.0
  %1830 = vmatprep.subr.mxu0 0.0
  %1831 = vmatpush1.msra.mxu0 0.0
  %1832 = vmatprep.subr.mxu0 0.0
  %1833 = vmatpush1.msra.mxu0 0.0
  %1834 = vmatprep.subr.mxu0 0.0
  %1835 = vmatpush1.msra.mxu0 0.0
  %1836 = vmatprep.subr.mxu0 0.0
  %1837 = vmatpush1.msra.mxu0 0.0
  %1838 = vmatprep.subr.mxu0 0.0
  %1839 = vmatpush1.msra.mxu0 0.0
  %1840 = vmatprep.subr.mxu0 0.0
  %1841 = vmatpush1.msra.mxu0 0.0
  %1842 = vmatprep.subr.mxu0 0.0
  %1843 = vmatpush1.msra.mxu0 0.0
  %1844 = vmatprep.subr.mxu0 0.0
  %1845 = vmatpush1.msra.mxu0 0.0
  %1846 = vmatprep.mubr.f32.mxu0 0.0
  %1847 = vmatmul.mubr.f32.gmra.mrb[0].mxu0 %v1768
  %v1848 = vpop.f32.mrb[0].mxu0
  %v1849 = vadd.f32 %v1764, %v1848
  %v1850 = vpop.f32.mrb[0].mxu0
  %v1851 = vadd.f32 %v1764, %v1850
  %1852 = vdwg.mxu0
  %1853 = vmatprep.subr.mxu0 %v1780
  %1854 = vmatpush1.msra.mxu0 %v1777
  %1855 = vmatprep.subr.mxu0 0.0
  %1856 = vmatpush1.msra.mxu0 0.0
  %1857 = vmatprep.subr.mxu0 0.0
  %1858 = vmatpush1.msra.mxu0 0.0
  %1859 = vmatprep.subr.mxu0 0.0
  %1860 = vmatpush1.msra.mxu0 0.0
  %1861 = vmatprep.subr.mxu0 0.0
  %1862 = vmatpush1.msra.mxu0 0.0
  %1863 = vmatprep.subr.mxu0 0.0
  %1864 = vmatpush1.msra.mxu0 0.0
  %1865 = vmatprep.subr.mxu0 0.0
  %1866 = vmatpush1.msra.mxu0 0.0
  %1867 = vmatprep.subr.mxu0 0.0
  %1868 = vmatpush1.msra.mxu0 0.0
  %1869 = vmatprep.subr.mxu0 0.0
  %1870 = vmatpush1.msra.mxu0 0.0
  %1871 = vmatprep.subr.mxu0 0.0
  %1872 = vmatpush1.msra.mxu0 0.0
  %1873 = vmatprep.subr.mxu0 0.0
  %1874 = vmatpush1.msra.mxu0 0.0
  %1875 = vmatprep.subr.mxu0 0.0
  %1876 = vmatpush1.msra.mxu0 0.0
  %1877 = vmatprep.subr.mxu0 0.0
  %1878 = vmatpush1.msra.mxu0 0.0
  %1879 = vmatprep.subr.mxu0 0.0
  %1880 = vmatpush1.msra.mxu0 0.0
  %1881 = vmatprep.subr.mxu0 0.0
  %1882 = vmatpush1.msra.mxu0 0.0
  %1883 = vmatprep.subr.mxu0 0.0
  %1884 = vmatpush1.msra.mxu0 0.0
  %1885 = vmatprep.subr.mxu0 0.0
  %1886 = vmatpush1.msra.mxu0 0.0
  %1887 = vmatprep.subr.mxu0 0.0
  %1888 = vmatpush1.msra.mxu0 0.0
  %1889 = vmatprep.subr.mxu0 0.0
  %1890 = vmatpush1.msra.mxu0 0.0
  %1891 = vmatprep.subr.mxu0 0.0
  %1892 = vmatpush1.msra.mxu0 0.0
  %1893 = vmatprep.subr.mxu0 0.0
  %1894 = vmatpush1.msra.mxu0 0.0
  %1895 = vmatprep.subr.mxu0 0.0
  %1896 = vmatpush1.msra.mxu0 0.0
  %1897 = vmatprep.subr.mxu0 0.0
  %1898 = vmatpush1.msra.mxu0 0.0
  %1899 = vmatprep.subr.mxu0 0.0
  %1900 = vmatpush1.msra.mxu0 0.0
  %1901 = vmatprep.subr.mxu0 0.0
  %1902 = vmatpush1.msra.mxu0 0.0
  %1903 = vmatprep.subr.mxu0 0.0
  %1904 = vmatpush1.msra.mxu0 0.0
  %1905 = vmatprep.subr.mxu0 0.0
  %1906 = vmatpush1.msra.mxu0 0.0
  %1907 = vmatprep.subr.mxu0 0.0
  %1908 = vmatpush1.msra.mxu0 0.0
  %1909 = vmatprep.subr.mxu0 0.0
  %1910 = vmatpush1.msra.mxu0 0.0
  %1911 = vmatprep.subr.mxu0 0.0
  %1912 = vmatpush1.msra.mxu0 0.0
  %1913 = vmatprep.subr.mxu0 0.0
  %1914 = vmatpush1.msra.mxu0 0.0
  %1915 = vmatprep.subr.mxu0 0.0
  %1916 = vmatpush1.msra.mxu0 0.0
  %1917 = vmatprep.mubr.f32.mxu0 0.0
  %1918 = vmatmul.mubr.f32.gmra.mrb[0].mxu0 %v1768
  %v1919 = vpop.f32.mrb[0].mxu0
  %v1920 = vadd.f32 %v1764, %v1919
  %v1921 = vpop.f32.mrb[0].mxu0
  %v1922 = vadd.f32 %v1764, %v1921
  %1923 = vdwg.mxu0
  %v1924 = vadd.f32 %v1849, %v1851
  %1925 = vadd.xlane.f32.xlu0 %v1924
  %v1926 = vpop.xlane.xlu0 %1925
  %v1927 = vrot.slane %v1926, 4
  %v1928 = vadd.f32 %v1926, %v1927
  %v1929 = vrot.slane %v1928, 2
  %v1930 = vadd.f32 %v1928, %v1929
  %v1931 = vrot.slane %v1930, 1
  %v1932 = vadd.f32 %v1930, %v1931
  %v1933 = vadd.f32 %v1920, %v1922
  %1934 = vadd.xlane.f32.xlu0 %v1933
  %v1935 = vpop.xlane.xlu0 %1934
  %v1936 = vrot.slane %v1935, 4
  %v1937 = vadd.f32 %v1935, %v1936
  %v1938 = vrot.slane %v1937, 2
  %v1939 = vadd.f32 %v1937, %v1938
  %v1940 = vrot.slane %v1939, 1
  %v1941 = vadd.f32 %v1939, %v1940
  %v1942 = vsel %vm39, %v1932, %v1941
  %v1943 = vsel %vm40, %v1932, %v1941
  %v1944 = vsel %vm41, %v1932, %v1941
  %v1945 = vsel %vm42, %v1932, %v1941
  %v1946 = vmul.f32 %v1942, 0.00048828125
  %v1947 = vmul.f32 %v1943, 0.00048828125
  %v1948 = vmul.f32 %v1944, 0.00048828125
  %v1949 = vmul.f32 %v1945, 0.00048828125
  %v1950 = vsub.f32 %v1849, %v1946
  %v1951 = vsub.f32 %v1851, %v1947
  %v1952 = vsub.f32 %v1920, %v1948
  %v1953 = vsub.f32 %v1922, %v1949
  %v1954 = vmul.f32 %v1950, %v1950
  %v1955 = vmul.f32 %v1951, %v1951
  %v1956 = vmul.f32 %v1952, %v1952
  %v1957 = vmul.f32 %v1953, %v1953
  %v1958 = vadd.f32 %v1954, %v1955
  %1959 = vadd.xlane.f32.xlu0 %v1958
  %v1960 = vpop.xlane.xlu0 %1959
  %v1961 = vrot.slane %v1960, 4
  %v1962 = vadd.f32 %v1960, %v1961
  %v1963 = vrot.slane %v1962, 2
  %v1964 = vadd.f32 %v1962, %v1963
  %v1965 = vrot.slane %v1964, 1
  %v1966 = vadd.f32 %v1964, %v1965
  %v1967 = vadd.f32 %v1956, %v1957
  %1968 = vadd.xlane.f32.xlu0 %v1967
  %v1969 = vpop.xlane.xlu0 %1968
  %v1970 = vrot.slane %v1969, 4
  %v1971 = vadd.f32 %v1969, %v1970
  %v1972 = vrot.slane %v1971, 2
  %v1973 = vadd.f32 %v1971, %v1972
  %v1974 = vrot.slane %v1973, 1
  %v1975 = vadd.f32 %v1973, %v1974
  %v1976 = vsel %vm39, %v1966, %v1975
  %v1977 = vsel %vm40, %v1966, %v1975
  %v1978 = vsel %vm41, %v1966, %v1975
  %v1979 = vsel %vm42, %v1966, %v1975
  %v1980 = vmul.f32 %v1976, 0.00048828125
  %v1981 = vmul.f32 %v1977, 0.00048828125
  %v1982 = vmul.f32 %v1978, 0.00048828125
  %v1983 = vmul.f32 %v1979, 0.00048828125
  %v1984 = vadd.f32 %v1980, 1e-05
  %v1985 = vadd.f32 %v1981, 1e-05
  %v1986 = vadd.f32 %v1982, 1e-05
  %v1987 = vadd.f32 %v1983, 1e-05
  %v1988 = vrsqrt.pop %v1984
  %v1989 = vrsqrt.pop %v1985
  %v1990 = vrsqrt.pop %v1986
  %v1991 = vrsqrt.pop %v1987
  %1992 = vset.pattern.permute.xlu0 16
  %1993 = vperm.xlu0 %1992, %v23
  %v1994 = vpop.permute.xlu0 %1993
  %v1996 = vmul.f32 %v1988, %v1994
  %v1997 = vmul.f32 %v1989, %v1994
  %v1998 = vmul.f32 %v1990, %v1994
  %v1999 = vmul.f32 %v1991, %v1994
  %v2000 = vmul.f32 %v1950, %v1996
  %v2001 = vmul.f32 %v1951, %v1997
  %v2002 = vmul.f32 %v1952, %v1998
  %v2003 = vmul.f32 %v1953, %v1999
  %2004 = vset.pattern.permute.xlu0 17
  %2005 = vperm.xlu0 %2004, %v23
  %v2006 = vpop.permute.xlu0 %2005
  %v2008 = vadd.f32 %v2000, %v2006
  %v2009 = vadd.f32 %v2001, %v2006
  %v2010 = vadd.f32 %v2002, %v2006
  %v2011 = vadd.f32 %v2003, %v2006
  %v2012 = vmax.f32 %v2008, 0.0
  %v2013 = vmax.f32 %v2009, 0.0
  %v2014 = vmax.f32 %v2010, 0.0
  %v2015 = vmax.f32 %v2011, 0.0
  %v2016 = vtanh.pop %v2012
  %v2017 = vtanh.pop %v2013
  %v2018 = vtanh.pop %v2014
  %v2019 = vtanh.pop %v2015
  %v2020 = vmul.f32 %v1373, %v2016
  %v2021 = vmul.f32 %v1374, %v2017
  %v2022 = vmul.f32 %v1375, %v2018
  %v2023 = vmul.f32 %v1376, %v2019
  %2024 = vst [vmem:[%s3] sm:$0xff] %v2020
  %2025 = vst [vmem:[%s3 + $0x8] sm:$0xff] %v2021
  %s2026 = scalar_lea.vmem %s3, 16
  %2027 = vst [vmem:[%s2026] sm:$0xff] %v2022
  %2028 = vst [vmem:[%s2026 + $0x8] sm:$0xff] %v2023
  // Predicated region
  $region14: #{conv_block_pallas.1} parent=0 // pred_check
    _
  $region15: #{conv_block_pallas.1} parent=0 // pred_check_branch
    %2030 = sbr.rel (0) target = $region17
  $region16: #{conv_block_pallas.1} parent=0 // pred_region
    _
  $region17: #{conv_block_pallas.1} parent=0 // pred_fallthru
    _
  // Predicated region
  $region18: #{conv_block_pallas.1} parent=0 // pred_check
    _
  $region19: #{conv_block_pallas.1} parent=0 // pred_check_branch
    %2032 = sbr.rel (0) target = $region21
  $region20: #{conv_block_pallas.1} parent=0 // pred_region
    _
  $region21: #{conv_block_pallas.1} parent=0 // pred_fallthru
    _

</llo_original>
